<compile_context>
chip_gen: v6e
topology: v6e:2x2x1
jax: 0.10.0
libtpu: 0.0.40
codegen_flags: <defaults>
</compile_context>

<pallas_src>
import functools

import jax
import jax.numpy as jnp
from jax.experimental import pallas as pl
from jax.experimental.pallas import tpu as pltpu


def _round_up(n, m):
    return ((n + m - 1) // m) * m


# --------------------------------------------------------------- fused LSTM + FC kernel
def _fused_lstm_fc_kernel(*refs, num_layers, hidden):
    """refs = (x, [w_ih_t, w_hh_t, bias]*L, w1_t, b1, w2_t, b2, out, hseq_scratch)."""
    x_ref = refs[0]
    layer_refs = refs[1:1 + 3 * num_layers]
    w1_ref, b1_ref, w2_ref, b2_ref = refs[1 + 3 * num_layers:5 + 3 * num_layers]
    out_ref = refs[5 + 3 * num_layers]
    hseq_sc = refs[6 + 3 * num_layers]

    T, Bp, D_in = x_ref.shape
    H = hidden

    # Input to the current layer, flattened to (T*Bp, D_in) for one big input projection.
    seq = x_ref[...].reshape(T * Bp, D_in)

    h = jnp.zeros((Bp, H), jnp.float32)
    for layer in range(num_layers):
        wih_ref, whh_ref, b_ref = layer_refs[3 * layer:3 * layer + 3]
        w_hh = whh_ref[...]                                      # (H, 4H)

        # Hoisted (non-recurrent) half of the gates: one large MXU matmul per layer.
        xw = (jnp.dot(seq, wih_ref[...], preferred_element_type=jnp.float32)
              + b_ref[...])                                      # (T*Bp, 4H)

        h = jnp.zeros((Bp, H), jnp.float32)
        c = jnp.zeros((Bp, H), jnp.float32)
        last_layer = layer == num_layers - 1

        # Serial recurrence, fully unrolled (T is static and small).
        for t in range(T):
            gates = xw[t * Bp:(t + 1) * Bp, :] + jnp.dot(
                h, w_hh, preferred_element_type=jnp.float32)     # (Bp, 4H), order i|f|g|o
            # TODO(synk): for large H, reorder gate columns to 128-lane-aligned blocks.
            i_g = jax.nn.sigmoid(gates[:, 0:H])
            f_g = jax.nn.sigmoid(gates[:, H:2 * H])
            g_g = jnp.tanh(gates[:, 2 * H:3 * H])
            o_g = jax.nn.sigmoid(gates[:, 3 * H:4 * H])
            c = f_g * c + i_g * g_g
            h = o_g * jnp.tanh(c)
            if not last_layer:
                hseq_sc[t] = h                                   # feeds the next layer

        if not last_layer:
            # TODO(synk): inter-layer dropout is identity (inference semantics).
            seq = hseq_sc[...].reshape(T * Bp, H)

    # FC head fused onto the final hidden state: Linear -> ReLU -> Dropout(id) -> Linear.
    z = jnp.maximum(
        jnp.dot(h, w1_ref[...], preferred_element_type=jnp.float32) + b1_ref[...], 0.0)
    out_ref[...] = (jnp.dot(z, w2_ref[...], preferred_element_type=jnp.float32)
                    + b2_ref[...]).astype(out_ref.dtype)


# ------------------------------------------------------------------------------- wrapper
@jax.jit
def lstm_forecaster_forward(params, x_btd):
    """x_btd: (B, T, D) batch-first, like the PyTorch module.  Returns (B, output_dim)."""
    lstm_params = params["lstm"]
    fc = params["fc"]
    num_layers = len(lstm_params)
    H = lstm_params[0]["w_hh_t"].shape[0]
    B, T, _ = x_btd.shape
    O = fc["w2_t"].shape[1]
    Bp = max(8, _round_up(B, 8))                     # pad batch to a sublane multiple

    x = jnp.transpose(x_btd, (1, 0, 2)).astype(jnp.float32)       # (T, B, D) time-major
    if Bp != B:
        x = jnp.pad(x, ((0, 0), (0, Bp - B), (0, 0)))

    flat = [x]
    for lp in lstm_params:
        flat += [lp["w_ih_t"], lp["w_hh_t"], lp["bias"]]
    flat += [fc["w1_t"], fc["b1"], fc["w2_t"], fc["b2"]]

    vmem = pl.BlockSpec(memory_space=pltpu.MemorySpace.VMEM)
    kernel = functools.partial(_fused_lstm_fc_kernel, num_layers=num_layers, hidden=H)
    out = pl.pallas_call(
        kernel,
        out_shape=jax.ShapeDtypeStruct((Bp, O), jnp.float32),
        in_specs=[vmem] * len(flat),
        out_specs=vmem,
        scratch_shapes=[pltpu.VMEM((T, Bp, H), jnp.float32)],     # inter-layer h sequence
    )(*flat)
    return out[:B]


# -------------------------------------------------------------------------------- params
def init_params(key, input_dim, hidden_dim, num_layers, output_dim):
    """Deterministic uniform(-1/sqrt(H), 1/sqrt(H)) init, mirroring PyTorch shapes."""
    k = 1.0 / jnp.sqrt(jnp.float32(hidden_dim))
    params = {"lstm": []}
    for layer in range(num_layers):
        d_in = input_dim if layer == 0 else hidden_dim
        key, k1, k2, k3, k4 = jax.random.split(key, 5)
        w_ih = jax.random.uniform(k1, (4 * hidden_dim, d_in), jnp.float32, -k, k)
        w_hh = jax.random.uniform(k2, (4 * hidden_dim, hidden_dim), jnp.float32, -k, k)
        b_ih = jax.random.uniform(k3, (4 * hidden_dim,), jnp.float32, -k, k)
        b_hh = jax.random.uniform(k4, (4 * hidden_dim,), jnp.float32, -k, k)
        params["lstm"].append({
            "w_ih_t": w_ih.T,                               # (d_in, 4H)
            "w_hh_t": w_hh.T,                               # (H, 4H)
            "bias": (b_ih + b_hh)[None, :],                 # (1, 4H)
        })
    half = hidden_dim // 2
    key, k1, k2, k3, k4 = jax.random.split(key, 5)
    params["fc"] = {
        "w1_t": jax.random.uniform(k1, (hidden_dim, half), jnp.float32, -k, k),
        "b1": jax.random.uniform(k2, (1, half), jnp.float32, -k, k),
        "w2_t": jax.random.uniform(k3, (half, output_dim), jnp.float32, -k, k),
        "b2": jax.random.uniform(k4, (1, output_dim), jnp.float32, -k, k),
    }
    return params


# ----------------------------------------------------------------------------- reference
def _reference_forward(params, x_btd):
    x = jnp.transpose(x_btd, (1, 0, 2)).astype(jnp.float32)
    T, B, _ = x.shape
    for lp in params["lstm"]:
        H = lp["w_hh_t"].shape[0]
        h = jnp.zeros((B, H), jnp.float32)
        c = jnp.zeros((B, H), jnp.float32)
        outs = []
        for t in range(T):
            gates = x[t] @ lp["w_ih_t"] + h @ lp["w_hh_t"] + lp["bias"]
            i = jax.nn.sigmoid(gates[:, 0:H])
            f = jax.nn.sigmoid(gates[:, H:2 * H])
            g = jnp.tanh(gates[:, 2 * H:3 * H])
            o = jax.nn.sigmoid(gates[:, 3 * H:4 * H])
            c = f * c + i * g
            h = o * jnp.tanh(c)
            outs.append(h)
        x = jnp.stack(outs, axis=0)
    h_last = x[-1]
    fc = params["fc"]
    z = jnp.maximum(h_last @ fc["w1_t"] + fc["b1"], 0.0)
    return z @ fc["w2_t"] + fc["b2"]


if __name__ == "__main__":
    B, T, D = 2, 8, 8           # batch, seq_len, input_dim
    H, L, O = 32, 2, 4          # hidden_dim, num_layers, output_dim

    key = jax.random.PRNGKey(0)
    pkey, xkey = jax.random.split(key)
    params = init_params(pkey, D, H, L, O)
    x = jax.random.normal(xkey, (B, T, D), jnp.float32)

    out = lstm_forecaster_forward(params, x)
    out = jax.block_until_ready(out)

    ref = _reference_forward(params, x)
    assert out.shape == (B, O), out.shape
    assert jnp.allclose(out, ref, atol=1e-4, rtol=1e-4), (out, ref)

    print("KERNEL_OK")
</pallas_src>

<mosaic_0001>
module attributes {stable_mosaic.version = 11 : i64} {
  func.func @_fused_lstm_fc_kernel(%arg0: memref<8x8x8xf32, #tpu.memory_space<vmem>>, %arg1: memref<8x128xf32, #tpu.memory_space<vmem>>, %arg2: memref<32x128xf32, #tpu.memory_space<vmem>>, %arg3: memref<1x128xf32, #tpu.memory_space<vmem>>, %arg4: memref<32x128xf32, #tpu.memory_space<vmem>>, %arg5: memref<32x128xf32, #tpu.memory_space<vmem>>, %arg6: memref<1x128xf32, #tpu.memory_space<vmem>>, %arg7: memref<32x16xf32, #tpu.memory_space<vmem>>, %arg8: memref<1x16xf32, #tpu.memory_space<vmem>>, %arg9: memref<16x4xf32, #tpu.memory_space<vmem>>, %arg10: memref<1x4xf32, #tpu.memory_space<vmem>>, %arg11: memref<8x4xf32, #tpu.memory_space<vmem>>, %arg12: memref<8x8x32xf32, #tpu.memory_space<vmem>>) attributes {dimension_semantics = [], scalar_prefetch = 0 : i64, scratch_operands = 1 : i64, tpu.core_type = #tpu.core_type<tc>} {
    %c0 = arith.constant 0 : index
    %c0_0 = arith.constant 0 : index
    %c0_1 = arith.constant 0 : index
    %0 = vector.load %arg0[%c0, %c0_0, %c0_1] : memref<8x8x8xf32, #tpu.memory_space<vmem>>, vector<8x8x8xf32>
    %1 = vector.shape_cast %0 : vector<8x8x8xf32> to vector<64x8xf32>
    %c0_2 = arith.constant 0 : index
    %c0_3 = arith.constant 0 : index
    %2 = vector.load %arg2[%c0_2, %c0_3] : memref<32x128xf32, #tpu.memory_space<vmem>>, vector<32x128xf32>
    %c0_4 = arith.constant 0 : index
    %c0_5 = arith.constant 0 : index
    %3 = vector.load %arg1[%c0_4, %c0_5] : memref<8x128xf32, #tpu.memory_space<vmem>>, vector<8x128xf32>
    %cst = arith.constant dense<0.000000e+00> : vector<64x128xf32>
    %4 = tpu.matmul %1, %3, %cst {dimension_numbers = #tpu.dot_dimension_numbers<[1], [0], [0], [1], [0, 0, 1, 1], [], []>} : vector<64x8xf32>, vector<8x128xf32>, vector<64x128xf32> -> vector<64x128xf32>
    %c0_6 = arith.constant 0 : index
    %c0_7 = arith.constant 0 : index
    %5 = vector.load %arg3[%c0_6, %c0_7] : memref<1x128xf32, #tpu.memory_space<vmem>>, vector<1x128xf32>
    %6 = vector.broadcast %5 : vector<1x128xf32> to vector<64x128xf32>
    %7 = arith.addf %4, %6 : vector<64x128xf32>
    %cst_8 = arith.constant 0.000000e+00 : f32
    %8 = vector.broadcast %cst_8 : f32 to vector<8x32xf32>
    %cst_9 = arith.constant 0.000000e+00 : f32
    %9 = vector.broadcast %cst_9 : f32 to vector<8x32xf32>
    %10 = vector.extract_strided_slice %7 {offsets = [0, 0], sizes = [8, 128], strides = [1, 1]} : vector<64x128xf32> to vector<8x128xf32>
    %cst_10 = arith.constant dense<0.000000e+00> : vector<8x128xf32>
    %11 = tpu.matmul %8, %2, %cst_10 {dimension_numbers = #tpu.dot_dimension_numbers<[1], [0], [0], [1], [0, 0, 1, 1], [], []>} : vector<8x32xf32>, vector<32x128xf32>, vector<8x128xf32> -> vector<8x128xf32>
    %12 = arith.addf %10, %11 : vector<8x128xf32>
    %13 = vector.extract_strided_slice %12 {offsets = [0, 0], sizes = [8, 32], strides = [1, 1]} : vector<8x128xf32> to vector<8x32xf32>
    %14 = arith.negf %13 : vector<8x32xf32>
    %15 = math.exp %14 : vector<8x32xf32>
    %cst_11 = arith.constant 1.000000e+00 : f32
    %16 = vector.broadcast %cst_11 : f32 to vector<8x32xf32>
    %17 = arith.addf %16, %15 : vector<8x32xf32>
    %18 = arith.divf %16, %17 : vector<8x32xf32>
    %19 = vector.extract_strided_slice %12 {offsets = [0, 32], sizes = [8, 32], strides = [1, 1]} : vector<8x128xf32> to vector<8x32xf32>
    %20 = arith.negf %19 : vector<8x32xf32>
    %21 = math.exp %20 : vector<8x32xf32>
    %cst_12 = arith.constant 1.000000e+00 : f32
    %22 = vector.broadcast %cst_12 : f32 to vector<8x32xf32>
    %23 = arith.addf %22, %21 : vector<8x32xf32>
    %24 = arith.divf %22, %23 : vector<8x32xf32>
    %25 = vector.extract_strided_slice %12 {offsets = [0, 64], sizes = [8, 32], strides = [1, 1]} : vector<8x128xf32> to vector<8x32xf32>
    %26 = math.tanh %25 : vector<8x32xf32>
    %27 = vector.extract_strided_slice %12 {offsets = [0, 96], sizes = [8, 32], strides = [1, 1]} : vector<8x128xf32> to vector<8x32xf32>
    %28 = arith.negf %27 : vector<8x32xf32>
    %29 = math.exp %28 : vector<8x32xf32>
    %cst_13 = arith.constant 1.000000e+00 : f32
    %30 = vector.broadcast %cst_13 : f32 to vector<8x32xf32>
    %31 = arith.addf %30, %29 : vector<8x32xf32>
    %32 = arith.divf %30, %31 : vector<8x32xf32>
    %33 = arith.mulf %24, %9 : vector<8x32xf32>
    %34 = arith.mulf %18, %26 : vector<8x32xf32>
    %35 = arith.addf %33, %34 : vector<8x32xf32>
    %36 = math.tanh %35 : vector<8x32xf32>
    %37 = arith.mulf %32, %36 : vector<8x32xf32>
    %c0_14 = arith.constant 0 : index
    %c0_15 = arith.constant 0 : index
    %c0_16 = arith.constant 0 : index
    %38 = vector.load %arg12[%c0_14, %c0_15, %c0_16] : memref<8x8x32xf32, #tpu.memory_space<vmem>>, vector<1x8x32xf32>
    %39 = vector.shape_cast %38 : vector<1x8x32xf32> to vector<8x32xf32>
    %40 = vector.shape_cast %37 : vector<8x32xf32> to vector<1x8x32xf32>
    tpu.vector_store %arg12[%c0_14, %c0_15, %c0_16], %40 {strides = array<i32>} : memref<8x8x32xf32, #tpu.memory_space<vmem>>, vector<1x8x32xf32>,
    %41 = vector.extract_strided_slice %7 {offsets = [8, 0], sizes = [8, 128], strides = [1, 1]} : vector<64x128xf32> to vector<8x128xf32>
    %cst_17 = arith.constant dense<0.000000e+00> : vector<8x128xf32>
    %42 = tpu.matmul %37, %2, %cst_17 {dimension_numbers = #tpu.dot_dimension_numbers<[1], [0], [0], [1], [0, 0, 1, 1], [], []>} : vector<8x32xf32>, vector<32x128xf32>, vector<8x128xf32> -> vector<8x128xf32>
    %43 = arith.addf %41, %42 : vector<8x128xf32>
    %44 = vector.extract_strided_slice %43 {offsets = [0, 0], sizes = [8, 32], strides = [1, 1]} : vector<8x128xf32> to vector<8x32xf32>
    %45 = arith.negf %44 : vector<8x32xf32>
    %46 = math.exp %45 : vector<8x32xf32>
    %cst_18 = arith.constant 1.000000e+00 : f32
    %47 = vector.broadcast %cst_18 : f32 to vector<8x32xf32>
    %48 = arith.addf %47, %46 : vector<8x32xf32>
    %49 = arith.divf %47, %48 : vector<8x32xf32>
    %50 = vector.extract_strided_slice %43 {offsets = [0, 32], sizes = [8, 32], strides = [1, 1]} : vector<8x128xf32> to vector<8x32xf32>
    %51 = arith.negf %50 : vector<8x32xf32>
    %52 = math.exp %51 : vector<8x32xf32>
    %cst_19 = arith.constant 1.000000e+00 : f32
    %53 = vector.broadcast %cst_19 : f32 to vector<8x32xf32>
    %54 = arith.addf %53, %52 : vector<8x32xf32>
    %55 = arith.divf %53, %54 : vector<8x32xf32>
    %56 = vector.extract_strided_slice %43 {offsets = [0, 64], sizes = [8, 32], strides = [1, 1]} : vector<8x128xf32> to vector<8x32xf32>
    %57 = math.tanh %56 : vector<8x32xf32>
    %58 = vector.extract_strided_slice %43 {offsets = [0, 96], sizes = [8, 32], strides = [1, 1]} : vector<8x128xf32> to vector<8x32xf32>
    %59 = arith.negf %58 : vector<8x32xf32>
    %60 = math.exp %59 : vector<8x32xf32>
    %cst_20 = arith.constant 1.000000e+00 : f32
    %61 = vector.broadcast %cst_20 : f32 to vector<8x32xf32>
    %62 = arith.addf %61, %60 : vector<8x32xf32>
    %63 = arith.divf %61, %62 : vector<8x32xf32>
    %64 = arith.mulf %55, %35 : vector<8x32xf32>
    %65 = arith.mulf %49, %57 : vector<8x32xf32>
    %66 = arith.addf %64, %65 : vector<8x32xf32>
    %67 = math.tanh %66 : vector<8x32xf32>
    %68 = arith.mulf %63, %67 : vector<8x32xf32>
    %c1 = arith.constant 1 : index
    %c0_21 = arith.constant 0 : index
    %c0_22 = arith.constant 0 : index
    %69 = vector.load %arg12[%c1, %c0_21, %c0_22] : memref<8x8x32xf32, #tpu.memory_space<vmem>>, vector<1x8x32xf32>
    %70 = vector.shape_cast %69 : vector<1x8x32xf32> to vector<8x32xf32>
    %71 = vector.shape_cast %68 : vector<8x32xf32> to vector<1x8x32xf32>
    tpu.vector_store %arg12[%c1, %c0_21, %c0_22], %71 {strides = array<i32>} : memref<8x8x32xf32, #tpu.memory_space<vmem>>, vector<1x8x32xf32>,
    %72 = vector.extract_strided_slice %7 {offsets = [16, 0], sizes = [8, 128], strides = [1, 1]} : vector<64x128xf32> to vector<8x128xf32>
    %cst_23 = arith.constant dense<0.000000e+00> : vector<8x128xf32>
    %73 = tpu.matmul %68, %2, %cst_23 {dimension_numbers = #tpu.dot_dimension_numbers<[1], [0], [0], [1], [0, 0, 1, 1], [], []>} : vector<8x32xf32>, vector<32x128xf32>, vector<8x128xf32> -> vector<8x128xf32>
    %74 = arith.addf %72, %73 : vector<8x128xf32>
    %75 = vector.extract_strided_slice %74 {offsets = [0, 0], sizes = [8, 32], strides = [1, 1]} : vector<8x128xf32> to vector<8x32xf32>
    %76 = arith.negf %75 : vector<8x32xf32>
    %77 = math.exp %76 : vector<8x32xf32>
    %cst_24 = arith.constant 1.000000e+00 : f32
    %78 = vector.broadcast %cst_24 : f32 to vector<8x32xf32>
    %79 = arith.addf %78, %77 : vector<8x32xf32>
    %80 = arith.divf %78, %79 : vector<8x32xf32>
    %81 = vector.extract_strided_slice %74 {offsets = [0, 32], sizes = [8, 32], strides = [1, 1]} : vector<8x128xf32> to vector<8x32xf32>
    %82 = arith.negf %81 : vector<8x32xf32>
    %83 = math.exp %82 : vector<8x32xf32>
    %cst_25 = arith.constant 1.000000e+00 : f32
    %84 = vector.broadcast %cst_25 : f32 to vector<8x32xf32>
    %85 = arith.addf %84, %83 : vector<8x32xf32>
    %86 = arith.divf %84, %85 : vector<8x32xf32>
    %87 = vector.extract_strided_slice %74 {offsets = [0, 64], sizes = [8, 32], strides = [1, 1]} : vector<8x128xf32> to vector<8x32xf32>
    %88 = math.tanh %87 : vector<8x32xf32>
    %89 = vector.extract_strided_slice %74 {offsets = [0, 96], sizes = [8, 32], strides = [1, 1]} : vector<8x128xf32> to vector<8x32xf32>
    %90 = arith.negf %89 : vector<8x32xf32>
    %91 = math.exp %90 : vector<8x32xf32>
    %cst_26 = arith.constant 1.000000e+00 : f32
    %92 = vector.broadcast %cst_26 : f32 to vector<8x32xf32>
    %93 = arith.addf %92, %91 : vector<8x32xf32>
    %94 = arith.divf %92, %93 : vector<8x32xf32>
    %95 = arith.mulf %86, %66 : vector<8x32xf32>
    %96 = arith.mulf %80, %88 : vector<8x32xf32>
    %97 = arith.addf %95, %96 : vector<8x32xf32>
    %98 = math.tanh %97 : vector<8x32xf32>
    %99 = arith.mulf %94, %98 : vector<8x32xf32>
    %c2 = arith.constant 2 : index
    %c0_27 = arith.constant 0 : index
    %c0_28 = arith.constant 0 : index
    %100 = vector.load %arg12[%c2, %c0_27, %c0_28] : memref<8x8x32xf32, #tpu.memory_space<vmem>>, vector<1x8x32xf32>
    %101 = vector.shape_cast %100 : vector<1x8x32xf32> to vector<8x32xf32>
    %102 = vector.shape_cast %99 : vector<8x32xf32> to vector<1x8x32xf32>
    tpu.vector_store %arg12[%c2, %c0_27, %c0_28], %102 {strides = array<i32>} : memref<8x8x32xf32, #tpu.memory_space<vmem>>, vector<1x8x32xf32>,
    %103 = vector.extract_strided_slice %7 {offsets = [24, 0], sizes = [8, 128], strides = [1, 1]} : vector<64x128xf32> to vector<8x128xf32>
    %cst_29 = arith.constant dense<0.000000e+00> : vector<8x128xf32>
    %104 = tpu.matmul %99, %2, %cst_29 {dimension_numbers = #tpu.dot_dimension_numbers<[1], [0], [0], [1], [0, 0, 1, 1], [], []>} : vector<8x32xf32>, vector<32x128xf32>, vector<8x128xf32> -> vector<8x128xf32>
    %105 = arith.addf %103, %104 : vector<8x128xf32>
    %106 = vector.extract_strided_slice %105 {offsets = [0, 0], sizes = [8, 32], strides = [1, 1]} : vector<8x128xf32> to vector<8x32xf32>
    %107 = arith.negf %106 : vector<8x32xf32>
    %108 = math.exp %107 : vector<8x32xf32>
    %cst_30 = arith.constant 1.000000e+00 : f32
    %109 = vector.broadcast %cst_30 : f32 to vector<8x32xf32>
    %110 = arith.addf %109, %108 : vector<8x32xf32>
    %111 = arith.divf %109, %110 : vector<8x32xf32>
    %112 = vector.extract_strided_slice %105 {offsets = [0, 32], sizes = [8, 32], strides = [1, 1]} : vector<8x128xf32> to vector<8x32xf32>
    %113 = arith.negf %112 : vector<8x32xf32>
    %114 = math.exp %113 : vector<8x32xf32>
    %cst_31 = arith.constant 1.000000e+00 : f32
    %115 = vector.broadcast %cst_31 : f32 to vector<8x32xf32>
    %116 = arith.addf %115, %114 : vector<8x32xf32>
    %117 = arith.divf %115, %116 : vector<8x32xf32>
    %118 = vector.extract_strided_slice %105 {offsets = [0, 64], sizes = [8, 32], strides = [1, 1]} : vector<8x128xf32> to vector<8x32xf32>
    %119 = math.tanh %118 : vector<8x32xf32>
    %120 = vector.extract_strided_slice %105 {offsets = [0, 96], sizes = [8, 32], strides = [1, 1]} : vector<8x128xf32> to vector<8x32xf32>
    %121 = arith.negf %120 : vector<8x32xf32>
    %122 = math.exp %121 : vector<8x32xf32>
    %cst_32 = arith.constant 1.000000e+00 : f32
    %123 = vector.broadcast %cst_32 : f32 to vector<8x32xf32>
    %124 = arith.addf %123, %122 : vector<8x32xf32>
    %125 = arith.divf %123, %124 : vector<8x32xf32>
    %126 = arith.mulf %117, %97 : vector<8x32xf32>
    %127 = arith.mulf %111, %119 : vector<8x32xf32>
    %128 = arith.addf %126, %127 : vector<8x32xf32>
    %129 = math.tanh %128 : vector<8x32xf32>
    %130 = arith.mulf %125, %129 : vector<8x32xf32>
    %c3 = arith.constant 3 : index
    %c0_33 = arith.constant 0 : index
    %c0_34 = arith.constant 0 : index
    %131 = vector.load %arg12[%c3, %c0_33, %c0_34] : memref<8x8x32xf32, #tpu.memory_space<vmem>>, vector<1x8x32xf32>
    %132 = vector.shape_cast %131 : vector<1x8x32xf32> to vector<8x32xf32>
    %133 = vector.shape_cast %130 : vector<8x32xf32> to vector<1x8x32xf32>
    tpu.vector_store %arg12[%c3, %c0_33, %c0_34], %133 {strides = array<i32>} : memref<8x8x32xf32, #tpu.memory_space<vmem>>, vector<1x8x32xf32>,
    %134 = vector.extract_strided_slice %7 {offsets = [32, 0], sizes = [8, 128], strides = [1, 1]} : vector<64x128xf32> to vector<8x128xf32>
    %cst_35 = arith.constant dense<0.000000e+00> : vector<8x128xf32>
    %135 = tpu.matmul %130, %2, %cst_35 {dimension_numbers = #tpu.dot_dimension_numbers<[1], [0], [0], [1], [0, 0, 1, 1], [], []>} : vector<8x32xf32>, vector<32x128xf32>, vector<8x128xf32> -> vector<8x128xf32>
    %136 = arith.addf %134, %135 : vector<8x128xf32>
    %137 = vector.extract_strided_slice %136 {offsets = [0, 0], sizes = [8, 32], strides = [1, 1]} : vector<8x128xf32> to vector<8x32xf32>
    %138 = arith.negf %137 : vector<8x32xf32>
    %139 = math.exp %138 : vector<8x32xf32>
    %cst_36 = arith.constant 1.000000e+00 : f32
    %140 = vector.broadcast %cst_36 : f32 to vector<8x32xf32>
    %141 = arith.addf %140, %139 : vector<8x32xf32>
    %142 = arith.divf %140, %141 : vector<8x32xf32>
    %143 = vector.extract_strided_slice %136 {offsets = [0, 32], sizes = [8, 32], strides = [1, 1]} : vector<8x128xf32> to vector<8x32xf32>
    %144 = arith.negf %143 : vector<8x32xf32>
    %145 = math.exp %144 : vector<8x32xf32>
    %cst_37 = arith.constant 1.000000e+00 : f32
    %146 = vector.broadcast %cst_37 : f32 to vector<8x32xf32>
    %147 = arith.addf %146, %145 : vector<8x32xf32>
    %148 = arith.divf %146, %147 : vector<8x32xf32>
    %149 = vector.extract_strided_slice %136 {offsets = [0, 64], sizes = [8, 32], strides = [1, 1]} : vector<8x128xf32> to vector<8x32xf32>
    %150 = math.tanh %149 : vector<8x32xf32>
    %151 = vector.extract_strided_slice %136 {offsets = [0, 96], sizes = [8, 32], strides = [1, 1]} : vector<8x128xf32> to vector<8x32xf32>
    %152 = arith.negf %151 : vector<8x32xf32>
    %153 = math.exp %152 : vector<8x32xf32>
    %cst_38 = arith.constant 1.000000e+00 : f32
    %154 = vector.broadcast %cst_38 : f32 to vector<8x32xf32>
    %155 = arith.addf %154, %153 : vector<8x32xf32>
    %156 = arith.divf %154, %155 : vector<8x32xf32>
    %157 = arith.mulf %148, %128 : vector<8x32xf32>
    %158 = arith.mulf %142, %150 : vector<8x32xf32>
    %159 = arith.addf %157, %158 : vector<8x32xf32>
    %160 = math.tanh %159 : vector<8x32xf32>
    %161 = arith.mulf %156, %160 : vector<8x32xf32>
    %c4 = arith.constant 4 : index
    %c0_39 = arith.constant 0 : index
    %c0_40 = arith.constant 0 : index
    %162 = vector.load %arg12[%c4, %c0_39, %c0_40] : memref<8x8x32xf32, #tpu.memory_space<vmem>>, vector<1x8x32xf32>
    %163 = vector.shape_cast %162 : vector<1x8x32xf32> to vector<8x32xf32>
    %164 = vector.shape_cast %161 : vector<8x32xf32> to vector<1x8x32xf32>
    tpu.vector_store %arg12[%c4, %c0_39, %c0_40], %164 {strides = array<i32>} : memref<8x8x32xf32, #tpu.memory_space<vmem>>, vector<1x8x32xf32>,
    %165 = vector.extract_strided_slice %7 {offsets = [40, 0], sizes = [8, 128], strides = [1, 1]} : vector<64x128xf32> to vector<8x128xf32>
    %cst_41 = arith.constant dense<0.000000e+00> : vector<8x128xf32>
    %166 = tpu.matmul %161, %2, %cst_41 {dimension_numbers = #tpu.dot_dimension_numbers<[1], [0], [0], [1], [0, 0, 1, 1], [], []>} : vector<8x32xf32>, vector<32x128xf32>, vector<8x128xf32> -> vector<8x128xf32>
    %167 = arith.addf %165, %166 : vector<8x128xf32>
    %168 = vector.extract_strided_slice %167 {offsets = [0, 0], sizes = [8, 32], strides = [1, 1]} : vector<8x128xf32> to vector<8x32xf32>
    %169 = arith.negf %168 : vector<8x32xf32>
    %170 = math.exp %169 : vector<8x32xf32>
    %cst_42 = arith.constant 1.000000e+00 : f32
    %171 = vector.broadcast %cst_42 : f32 to vector<8x32xf32>
    %172 = arith.addf %171, %170 : vector<8x32xf32>
    %173 = arith.divf %171, %172 : vector<8x32xf32>
    %174 = vector.extract_strided_slice %167 {offsets = [0, 32], sizes = [8, 32], strides = [1, 1]} : vector<8x128xf32> to vector<8x32xf32>
    %175 = arith.negf %174 : vector<8x32xf32>
    %176 = math.exp %175 : vector<8x32xf32>
    %cst_43 = arith.constant 1.000000e+00 : f32
    %177 = vector.broadcast %cst_43 : f32 to vector<8x32xf32>
    %178 = arith.addf %177, %176 : vector<8x32xf32>
    %179 = arith.divf %177, %178 : vector<8x32xf32>
    %180 = vector.extract_strided_slice %167 {offsets = [0, 64], sizes = [8, 32], strides = [1, 1]} : vector<8x128xf32> to vector<8x32xf32>
    %181 = math.tanh %180 : vector<8x32xf32>
    %182 = vector.extract_strided_slice %167 {offsets = [0, 96], sizes = [8, 32], strides = [1, 1]} : vector<8x128xf32> to vector<8x32xf32>
    %183 = arith.negf %182 : vector<8x32xf32>
    %184 = math.exp %183 : vector<8x32xf32>
    %cst_44 = arith.constant 1.000000e+00 : f32
    %185 = vector.broadcast %cst_44 : f32 to vector<8x32xf32>
    %186 = arith.addf %185, %184 : vector<8x32xf32>
    %187 = arith.divf %185, %186 : vector<8x32xf32>
    %188 = arith.mulf %179, %159 : vector<8x32xf32>
    %189 = arith.mulf %173, %181 : vector<8x32xf32>
    %190 = arith.addf %188, %189 : vector<8x32xf32>
    %191 = math.tanh %190 : vector<8x32xf32>
    %192 = arith.mulf %187, %191 : vector<8x32xf32>
    %c5 = arith.constant 5 : index
    %c0_45 = arith.constant 0 : index
    %c0_46 = arith.constant 0 : index
    %193 = vector.load %arg12[%c5, %c0_45, %c0_46] : memref<8x8x32xf32, #tpu.memory_space<vmem>>, vector<1x8x32xf32>
    %194 = vector.shape_cast %193 : vector<1x8x32xf32> to vector<8x32xf32>
    %195 = vector.shape_cast %192 : vector<8x32xf32> to vector<1x8x32xf32>
    tpu.vector_store %arg12[%c5, %c0_45, %c0_46], %195 {strides = array<i32>} : memref<8x8x32xf32, #tpu.memory_space<vmem>>, vector<1x8x32xf32>,
    %196 = vector.extract_strided_slice %7 {offsets = [48, 0], sizes = [8, 128], strides = [1, 1]} : vector<64x128xf32> to vector<8x128xf32>
    %cst_47 = arith.constant dense<0.000000e+00> : vector<8x128xf32>
    %197 = tpu.matmul %192, %2, %cst_47 {dimension_numbers = #tpu.dot_dimension_numbers<[1], [0], [0], [1], [0, 0, 1, 1], [], []>} : vector<8x32xf32>, vector<32x128xf32>, vector<8x128xf32> -> vector<8x128xf32>
    %198 = arith.addf %196, %197 : vector<8x128xf32>
    %199 = vector.extract_strided_slice %198 {offsets = [0, 0], sizes = [8, 32], strides = [1, 1]} : vector<8x128xf32> to vector<8x32xf32>
    %200 = arith.negf %199 : vector<8x32xf32>
    %201 = math.exp %200 : vector<8x32xf32>
    %cst_48 = arith.constant 1.000000e+00 : f32
    %202 = vector.broadcast %cst_48 : f32 to vector<8x32xf32>
    %203 = arith.addf %202, %201 : vector<8x32xf32>
    %204 = arith.divf %202, %203 : vector<8x32xf32>
    %205 = vector.extract_strided_slice %198 {offsets = [0, 32], sizes = [8, 32], strides = [1, 1]} : vector<8x128xf32> to vector<8x32xf32>
    %206 = arith.negf %205 : vector<8x32xf32>
    %207 = math.exp %206 : vector<8x32xf32>
    %cst_49 = arith.constant 1.000000e+00 : f32
    %208 = vector.broadcast %cst_49 : f32 to vector<8x32xf32>
    %209 = arith.addf %208, %207 : vector<8x32xf32>
    %210 = arith.divf %208, %209 : vector<8x32xf32>
    %211 = vector.extract_strided_slice %198 {offsets = [0, 64], sizes = [8, 32], strides = [1, 1]} : vector<8x128xf32> to vector<8x32xf32>
    %212 = math.tanh %211 : vector<8x32xf32>
    %213 = vector.extract_strided_slice %198 {offsets = [0, 96], sizes = [8, 32], strides = [1, 1]} : vector<8x128xf32> to vector<8x32xf32>
    %214 = arith.negf %213 : vector<8x32xf32>
    %215 = math.exp %214 : vector<8x32xf32>
    %cst_50 = arith.constant 1.000000e+00 : f32
    %216 = vector.broadcast %cst_50 : f32 to vector<8x32xf32>
    %217 = arith.addf %216, %215 : vector<8x32xf32>
    %218 = arith.divf %216, %217 : vector<8x32xf32>
    %219 = arith.mulf %210, %190 : vector<8x32xf32>
    %220 = arith.mulf %204, %212 : vector<8x32xf32>
    %221 = arith.addf %219, %220 : vector<8x32xf32>
    %222 = math.tanh %221 : vector<8x32xf32>
    %223 = arith.mulf %218, %222 : vector<8x32xf32>
    %c6 = arith.constant 6 : index
    %c0_51 = arith.constant 0 : index
    %c0_52 = arith.constant 0 : index
    %224 = vector.load %arg12[%c6, %c0_51, %c0_52] : memref<8x8x32xf32, #tpu.memory_space<vmem>>, vector<1x8x32xf32>
    %225 = vector.shape_cast %224 : vector<1x8x32xf32> to vector<8x32xf32>
    %226 = vector.shape_cast %223 : vector<8x32xf32> to vector<1x8x32xf32>
    tpu.vector_store %arg12[%c6, %c0_51, %c0_52], %226 {strides = array<i32>} : memref<8x8x32xf32, #tpu.memory_space<vmem>>, vector<1x8x32xf32>,
    %227 = vector.extract_strided_slice %7 {offsets = [56, 0], sizes = [8, 128], strides = [1, 1]} : vector<64x128xf32> to vector<8x128xf32>
    %cst_53 = arith.constant dense<0.000000e+00> : vector<8x128xf32>
    %228 = tpu.matmul %223, %2, %cst_53 {dimension_numbers = #tpu.dot_dimension_numbers<[1], [0], [0], [1], [0, 0, 1, 1], [], []>} : vector<8x32xf32>, vector<32x128xf32>, vector<8x128xf32> -> vector<8x128xf32>
    %229 = arith.addf %227, %228 : vector<8x128xf32>
    %230 = vector.extract_strided_slice %229 {offsets = [0, 0], sizes = [8, 32], strides = [1, 1]} : vector<8x128xf32> to vector<8x32xf32>
    %231 = arith.negf %230 : vector<8x32xf32>
    %232 = math.exp %231 : vector<8x32xf32>
    %cst_54 = arith.constant 1.000000e+00 : f32
    %233 = vector.broadcast %cst_54 : f32 to vector<8x32xf32>
    %234 = arith.addf %233, %232 : vector<8x32xf32>
    %235 = arith.divf %233, %234 : vector<8x32xf32>
    %236 = vector.extract_strided_slice %229 {offsets = [0, 32], sizes = [8, 32], strides = [1, 1]} : vector<8x128xf32> to vector<8x32xf32>
    %237 = arith.negf %236 : vector<8x32xf32>
    %238 = math.exp %237 : vector<8x32xf32>
    %cst_55 = arith.constant 1.000000e+00 : f32
    %239 = vector.broadcast %cst_55 : f32 to vector<8x32xf32>
    %240 = arith.addf %239, %238 : vector<8x32xf32>
    %241 = arith.divf %239, %240 : vector<8x32xf32>
    %242 = vector.extract_strided_slice %229 {offsets = [0, 64], sizes = [8, 32], strides = [1, 1]} : vector<8x128xf32> to vector<8x32xf32>
    %243 = math.tanh %242 : vector<8x32xf32>
    %244 = vector.extract_strided_slice %229 {offsets = [0, 96], sizes = [8, 32], strides = [1, 1]} : vector<8x128xf32> to vector<8x32xf32>
    %245 = arith.negf %244 : vector<8x32xf32>
    %246 = math.exp %245 : vector<8x32xf32>
    %cst_56 = arith.constant 1.000000e+00 : f32
    %247 = vector.broadcast %cst_56 : f32 to vector<8x32xf32>
    %248 = arith.addf %247, %246 : vector<8x32xf32>
    %249 = arith.divf %247, %248 : vector<8x32xf32>
    %250 = arith.mulf %241, %221 : vector<8x32xf32>
    %251 = arith.mulf %235, %243 : vector<8x32xf32>
    %252 = arith.addf %250, %251 : vector<8x32xf32>
    %253 = math.tanh %252 : vector<8x32xf32>
    %254 = arith.mulf %249, %253 : vector<8x32xf32>
    %c7 = arith.constant 7 : index
    %c0_57 = arith.constant 0 : index
    %c0_58 = arith.constant 0 : index
    %255 = vector.load %arg12[%c7, %c0_57, %c0_58] : memref<8x8x32xf32, #tpu.memory_space<vmem>>, vector<1x8x32xf32>
    %256 = vector.shape_cast %255 : vector<1x8x32xf32> to vector<8x32xf32>
    %257 = vector.shape_cast %254 : vector<8x32xf32> to vector<1x8x32xf32>
    tpu.vector_store %arg12[%c7, %c0_57, %c0_58], %257 {strides = array<i32>} : memref<8x8x32xf32, #tpu.memory_space<vmem>>, vector<1x8x32xf32>,
    %c0_59 = arith.constant 0 : index
    %c0_60 = arith.constant 0 : index
    %c0_61 = arith.constant 0 : index
    %258 = vector.load %arg12[%c0_59, %c0_60, %c0_61] : memref<8x8x32xf32, #tpu.memory_space<vmem>>, vector<8x8x32xf32>
    %259 = vector.shape_cast %258 : vector<8x8x32xf32> to vector<64x32xf32>
    %c0_62 = arith.constant 0 : index
    %c0_63 = arith.constant 0 : index
    %260 = vector.load %arg5[%c0_62, %c0_63] : memref<32x128xf32, #tpu.memory_space<vmem>>, vector<32x128xf32>
    %c0_64 = arith.constant 0 : index
    %c0_65 = arith.constant 0 : index
    %261 = vector.load %arg4[%c0_64, %c0_65] : memref<32x128xf32, #tpu.memory_space<vmem>>, vector<32x128xf32>
    %cst_66 = arith.constant dense<0.000000e+00> : vector<64x128xf32>
    %262 = tpu.matmul %259, %261, %cst_66 {dimension_numbers = #tpu.dot_dimension_numbers<[1], [0], [0], [1], [0, 0, 1, 1], [], []>} : vector<64x32xf32>, vector<32x128xf32>, vector<64x128xf32> -> vector<64x128xf32>
    %c0_67 = arith.constant 0 : index
    %c0_68 = arith.constant 0 : index
    %263 = vector.load %arg6[%c0_67, %c0_68] : memref<1x128xf32, #tpu.memory_space<vmem>>, vector<1x128xf32>
    %264 = vector.broadcast %263 : vector<1x128xf32> to vector<64x128xf32>
    %265 = arith.addf %262, %264 : vector<64x128xf32>
    %cst_69 = arith.constant 0.000000e+00 : f32
    %266 = vector.broadcast %cst_69 : f32 to vector<8x32xf32>
    %cst_70 = arith.constant 0.000000e+00 : f32
    %267 = vector.broadcast %cst_70 : f32 to vector<8x32xf32>
    %268 = vector.extract_strided_slice %265 {offsets = [0, 0], sizes = [8, 128], strides = [1, 1]} : vector<64x128xf32> to vector<8x128xf32>
    %cst_71 = arith.constant dense<0.000000e+00> : vector<8x128xf32>
    %269 = tpu.matmul %266, %260, %cst_71 {dimension_numbers = #tpu.dot_dimension_numbers<[1], [0], [0], [1], [0, 0, 1, 1], [], []>} : vector<8x32xf32>, vector<32x128xf32>, vector<8x128xf32> -> vector<8x128xf32>
    %270 = arith.addf %268, %269 : vector<8x128xf32>
    %271 = vector.extract_strided_slice %270 {offsets = [0, 0], sizes = [8, 32], strides = [1, 1]} : vector<8x128xf32> to vector<8x32xf32>
    %272 = arith.negf %271 : vector<8x32xf32>
    %273 = math.exp %272 : vector<8x32xf32>
    %cst_72 = arith.constant 1.000000e+00 : f32
    %274 = vector.broadcast %cst_72 : f32 to vector<8x32xf32>
    %275 = arith.addf %274, %273 : vector<8x32xf32>
    %276 = arith.divf %274, %275 : vector<8x32xf32>
    %277 = vector.extract_strided_slice %270 {offsets = [0, 32], sizes = [8, 32], strides = [1, 1]} : vector<8x128xf32> to vector<8x32xf32>
    %278 = arith.negf %277 : vector<8x32xf32>
    %279 = math.exp %278 : vector<8x32xf32>
    %cst_73 = arith.constant 1.000000e+00 : f32
    %280 = vector.broadcast %cst_73 : f32 to vector<8x32xf32>
    %281 = arith.addf %280, %279 : vector<8x32xf32>
    %282 = arith.divf %280, %281 : vector<8x32xf32>
    %283 = vector.extract_strided_slice %270 {offsets = [0, 64], sizes = [8, 32], strides = [1, 1]} : vector<8x128xf32> to vector<8x32xf32>
    %284 = math.tanh %283 : vector<8x32xf32>
    %285 = vector.extract_strided_slice %270 {offsets = [0, 96], sizes = [8, 32], strides = [1, 1]} : vector<8x128xf32> to vector<8x32xf32>
    %286 = arith.negf %285 : vector<8x32xf32>
    %287 = math.exp %286 : vector<8x32xf32>
    %cst_74 = arith.constant 1.000000e+00 : f32
    %288 = vector.broadcast %cst_74 : f32 to vector<8x32xf32>
    %289 = arith.addf %288, %287 : vector<8x32xf32>
    %290 = arith.divf %288, %289 : vector<8x32xf32>
    %291 = arith.mulf %282, %267 : vector<8x32xf32>
    %292 = arith.mulf %276, %284 : vector<8x32xf32>
    %293 = arith.addf %291, %292 : vector<8x32xf32>
    %294 = math.tanh %293 : vector<8x32xf32>
    %295 = arith.mulf %290, %294 : vector<8x32xf32>
    %296 = vector.extract_strided_slice %265 {offsets = [8, 0], sizes = [8, 128], strides = [1, 1]} : vector<64x128xf32> to vector<8x128xf32>
    %cst_75 = arith.constant dense<0.000000e+00> : vector<8x128xf32>
    %297 = tpu.matmul %295, %260, %cst_75 {dimension_numbers = #tpu.dot_dimension_numbers<[1], [0], [0], [1], [0, 0, 1, 1], [], []>} : vector<8x32xf32>, vector<32x128xf32>, vector<8x128xf32> -> vector<8x128xf32>
    %298 = arith.addf %296, %297 : vector<8x128xf32>
    %299 = vector.extract_strided_slice %298 {offsets = [0, 0], sizes = [8, 32], strides = [1, 1]} : vector<8x128xf32> to vector<8x32xf32>
    %300 = arith.negf %299 : vector<8x32xf32>
    %301 = math.exp %300 : vector<8x32xf32>
    %cst_76 = arith.constant 1.000000e+00 : f32
    %302 = vector.broadcast %cst_76 : f32 to vector<8x32xf32>
    %303 = arith.addf %302, %301 : vector<8x32xf32>
    %304 = arith.divf %302, %303 : vector<8x32xf32>
    %305 = vector.extract_strided_slice %298 {offsets = [0, 32], sizes = [8, 32], strides = [1, 1]} : vector<8x128xf32> to vector<8x32xf32>
    %306 = arith.negf %305 : vector<8x32xf32>
    %307 = math.exp %306 : vector<8x32xf32>
    %cst_77 = arith.constant 1.000000e+00 : f32
    %308 = vector.broadcast %cst_77 : f32 to vector<8x32xf32>
    %309 = arith.addf %308, %307 : vector<8x32xf32>
    %310 = arith.divf %308, %309 : vector<8x32xf32>
    %311 = vector.extract_strided_slice %298 {offsets = [0, 64], sizes = [8, 32], strides = [1, 1]} : vector<8x128xf32> to vector<8x32xf32>
    %312 = math.tanh %311 : vector<8x32xf32>
    %313 = vector.extract_strided_slice %298 {offsets = [0, 96], sizes = [8, 32], strides = [1, 1]} : vector<8x128xf32> to vector<8x32xf32>
    %314 = arith.negf %313 : vector<8x32xf32>
    %315 = math.exp %314 : vector<8x32xf32>
    %cst_78 = arith.constant 1.000000e+00 : f32
    %316 = vector.broadcast %cst_78 : f32 to vector<8x32xf32>
    %317 = arith.addf %316, %315 : vector<8x32xf32>
    %318 = arith.divf %316, %317 : vector<8x32xf32>
    %319 = arith.mulf %310, %293 : vector<8x32xf32>
    %320 = arith.mulf %304, %312 : vector<8x32xf32>
    %321 = arith.addf %319, %320 : vector<8x32xf32>
    %322 = math.tanh %321 : vector<8x32xf32>
    %323 = arith.mulf %318, %322 : vector<8x32xf32>
    %324 = vector.extract_strided_slice %265 {offsets = [16, 0], sizes = [8, 128], strides = [1, 1]} : vector<64x128xf32> to vector<8x128xf32>
    %cst_79 = arith.constant dense<0.000000e+00> : vector<8x128xf32>
    %325 = tpu.matmul %323, %260, %cst_79 {dimension_numbers = #tpu.dot_dimension_numbers<[1], [0], [0], [1], [0, 0, 1, 1], [], []>} : vector<8x32xf32>, vector<32x128xf32>, vector<8x128xf32> -> vector<8x128xf32>
    %326 = arith.addf %324, %325 : vector<8x128xf32>
    %327 = vector.extract_strided_slice %326 {offsets = [0, 0], sizes = [8, 32], strides = [1, 1]} : vector<8x128xf32> to vector<8x32xf32>
    %328 = arith.negf %327 : vector<8x32xf32>
    %329 = math.exp %328 : vector<8x32xf32>
    %cst_80 = arith.constant 1.000000e+00 : f32
    %330 = vector.broadcast %cst_80 : f32 to vector<8x32xf32>
    %331 = arith.addf %330, %329 : vector<8x32xf32>
    %332 = arith.divf %330, %331 : vector<8x32xf32>
    %333 = vector.extract_strided_slice %326 {offsets = [0, 32], sizes = [8, 32], strides = [1, 1]} : vector<8x128xf32> to vector<8x32xf32>
    %334 = arith.negf %333 : vector<8x32xf32>
    %335 = math.exp %334 : vector<8x32xf32>
    %cst_81 = arith.constant 1.000000e+00 : f32
    %336 = vector.broadcast %cst_81 : f32 to vector<8x32xf32>
    %337 = arith.addf %336, %335 : vector<8x32xf32>
    %338 = arith.divf %336, %337 : vector<8x32xf32>
    %339 = vector.extract_strided_slice %326 {offsets = [0, 64], sizes = [8, 32], strides = [1, 1]} : vector<8x128xf32> to vector<8x32xf32>
    %340 = math.tanh %339 : vector<8x32xf32>
    %341 = vector.extract_strided_slice %326 {offsets = [0, 96], sizes = [8, 32], strides = [1, 1]} : vector<8x128xf32> to vector<8x32xf32>
    %342 = arith.negf %341 : vector<8x32xf32>
    %343 = math.exp %342 : vector<8x32xf32>
    %cst_82 = arith.constant 1.000000e+00 : f32
    %344 = vector.broadcast %cst_82 : f32 to vector<8x32xf32>
    %345 = arith.addf %344, %343 : vector<8x32xf32>
    %346 = arith.divf %344, %345 : vector<8x32xf32>
    %347 = arith.mulf %338, %321 : vector<8x32xf32>
    %348 = arith.mulf %332, %340 : vector<8x32xf32>
    %349 = arith.addf %347, %348 : vector<8x32xf32>
    %350 = math.tanh %349 : vector<8x32xf32>
    %351 = arith.mulf %346, %350 : vector<8x32xf32>
    %352 = vector.extract_strided_slice %265 {offsets = [24, 0], sizes = [8, 128], strides = [1, 1]} : vector<64x128xf32> to vector<8x128xf32>
    %cst_83 = arith.constant dense<0.000000e+00> : vector<8x128xf32>
    %353 = tpu.matmul %351, %260, %cst_83 {dimension_numbers = #tpu.dot_dimension_numbers<[1], [0], [0], [1], [0, 0, 1, 1], [], []>} : vector<8x32xf32>, vector<32x128xf32>, vector<8x128xf32> -> vector<8x128xf32>
    %354 = arith.addf %352, %353 : vector<8x128xf32>
    %355 = vector.extract_strided_slice %354 {offsets = [0, 0], sizes = [8, 32], strides = [1, 1]} : vector<8x128xf32> to vector<8x32xf32>
    %356 = arith.negf %355 : vector<8x32xf32>
    %357 = math.exp %356 : vector<8x32xf32>
    %cst_84 = arith.constant 1.000000e+00 : f32
    %358 = vector.broadcast %cst_84 : f32 to vector<8x32xf32>
    %359 = arith.addf %358, %357 : vector<8x32xf32>
    %360 = arith.divf %358, %359 : vector<8x32xf32>
    %361 = vector.extract_strided_slice %354 {offsets = [0, 32], sizes = [8, 32], strides = [1, 1]} : vector<8x128xf32> to vector<8x32xf32>
    %362 = arith.negf %361 : vector<8x32xf32>
    %363 = math.exp %362 : vector<8x32xf32>
    %cst_85 = arith.constant 1.000000e+00 : f32
    %364 = vector.broadcast %cst_85 : f32 to vector<8x32xf32>
    %365 = arith.addf %364, %363 : vector<8x32xf32>
    %366 = arith.divf %364, %365 : vector<8x32xf32>
    %367 = vector.extract_strided_slice %354 {offsets = [0, 64], sizes = [8, 32], strides = [1, 1]} : vector<8x128xf32> to vector<8x32xf32>
    %368 = math.tanh %367 : vector<8x32xf32>
    %369 = vector.extract_strided_slice %354 {offsets = [0, 96], sizes = [8, 32], strides = [1, 1]} : vector<8x128xf32> to vector<8x32xf32>
    %370 = arith.negf %369 : vector<8x32xf32>
    %371 = math.exp %370 : vector<8x32xf32>
    %cst_86 = arith.constant 1.000000e+00 : f32
    %372 = vector.broadcast %cst_86 : f32 to vector<8x32xf32>
    %373 = arith.addf %372, %371 : vector<8x32xf32>
    %374 = arith.divf %372, %373 : vector<8x32xf32>
    %375 = arith.mulf %366, %349 : vector<8x32xf32>
    %376 = arith.mulf %360, %368 : vector<8x32xf32>
    %377 = arith.addf %375, %376 : vector<8x32xf32>
    %378 = math.tanh %377 : vector<8x32xf32>
    %379 = arith.mulf %374, %378 : vector<8x32xf32>
    %380 = vector.extract_strided_slice %265 {offsets = [32, 0], sizes = [8, 128], strides = [1, 1]} : vector<64x128xf32> to vector<8x128xf32>
    %cst_87 = arith.constant dense<0.000000e+00> : vector<8x128xf32>
    %381 = tpu.matmul %379, %260, %cst_87 {dimension_numbers = #tpu.dot_dimension_numbers<[1], [0], [0], [1], [0, 0, 1, 1], [], []>} : vector<8x32xf32>, vector<32x128xf32>, vector<8x128xf32> -> vector<8x128xf32>
    %382 = arith.addf %380, %381 : vector<8x128xf32>
    %383 = vector.extract_strided_slice %382 {offsets = [0, 0], sizes = [8, 32], strides = [1, 1]} : vector<8x128xf32> to vector<8x32xf32>
    %384 = arith.negf %383 : vector<8x32xf32>
    %385 = math.exp %384 : vector<8x32xf32>
    %cst_88 = arith.constant 1.000000e+00 : f32
    %386 = vector.broadcast %cst_88 : f32 to vector<8x32xf32>
    %387 = arith.addf %386, %385 : vector<8x32xf32>
    %388 = arith.divf %386, %387 : vector<8x32xf32>
    %389 = vector.extract_strided_slice %382 {offsets = [0, 32], sizes = [8, 32], strides = [1, 1]} : vector<8x128xf32> to vector<8x32xf32>
    %390 = arith.negf %389 : vector<8x32xf32>
    %391 = math.exp %390 : vector<8x32xf32>
    %cst_89 = arith.constant 1.000000e+00 : f32
    %392 = vector.broadcast %cst_89 : f32 to vector<8x32xf32>
    %393 = arith.addf %392, %391 : vector<8x32xf32>
    %394 = arith.divf %392, %393 : vector<8x32xf32>
    %395 = vector.extract_strided_slice %382 {offsets = [0, 64], sizes = [8, 32], strides = [1, 1]} : vector<8x128xf32> to vector<8x32xf32>
    %396 = math.tanh %395 : vector<8x32xf32>
    %397 = vector.extract_strided_slice %382 {offsets = [0, 96], sizes = [8, 32], strides = [1, 1]} : vector<8x128xf32> to vector<8x32xf32>
    %398 = arith.negf %397 : vector<8x32xf32>
    %399 = math.exp %398 : vector<8x32xf32>
    %cst_90 = arith.constant 1.000000e+00 : f32
    %400 = vector.broadcast %cst_90 : f32 to vector<8x32xf32>
    %401 = arith.addf %400, %399 : vector<8x32xf32>
    %402 = arith.divf %400, %401 : vector<8x32xf32>
    %403 = arith.mulf %394, %377 : vector<8x32xf32>
    %404 = arith.mulf %388, %396 : vector<8x32xf32>
    %405 = arith.addf %403, %404 : vector<8x32xf32>
    %406 = math.tanh %405 : vector<8x32xf32>
    %407 = arith.mulf %402, %406 : vector<8x32xf32>
    %408 = vector.extract_strided_slice %265 {offsets = [40, 0], sizes = [8, 128], strides = [1, 1]} : vector<64x128xf32> to vector<8x128xf32>
    %cst_91 = arith.constant dense<0.000000e+00> : vector<8x128xf32>
    %409 = tpu.matmul %407, %260, %cst_91 {dimension_numbers = #tpu.dot_dimension_numbers<[1], [0], [0], [1], [0, 0, 1, 1], [], []>} : vector<8x32xf32>, vector<32x128xf32>, vector<8x128xf32> -> vector<8x128xf32>
    %410 = arith.addf %408, %409 : vector<8x128xf32>
    %411 = vector.extract_strided_slice %410 {offsets = [0, 0], sizes = [8, 32], strides = [1, 1]} : vector<8x128xf32> to vector<8x32xf32>
    %412 = arith.negf %411 : vector<8x32xf32>
    %413 = math.exp %412 : vector<8x32xf32>
    %cst_92 = arith.constant 1.000000e+00 : f32
    %414 = vector.broadcast %cst_92 : f32 to vector<8x32xf32>
    %415 = arith.addf %414, %413 : vector<8x32xf32>
    %416 = arith.divf %414, %415 : vector<8x32xf32>
    %417 = vector.extract_strided_slice %410 {offsets = [0, 32], sizes = [8, 32], strides = [1, 1]} : vector<8x128xf32> to vector<8x32xf32>
    %418 = arith.negf %417 : vector<8x32xf32>
    %419 = math.exp %418 : vector<8x32xf32>
    %cst_93 = arith.constant 1.000000e+00 : f32
    %420 = vector.broadcast %cst_93 : f32 to vector<8x32xf32>
    %421 = arith.addf %420, %419 : vector<8x32xf32>
    %422 = arith.divf %420, %421 : vector<8x32xf32>
    %423 = vector.extract_strided_slice %410 {offsets = [0, 64], sizes = [8, 32], strides = [1, 1]} : vector<8x128xf32> to vector<8x32xf32>
    %424 = math.tanh %423 : vector<8x32xf32>
    %425 = vector.extract_strided_slice %410 {offsets = [0, 96], sizes = [8, 32], strides = [1, 1]} : vector<8x128xf32> to vector<8x32xf32>
    %426 = arith.negf %425 : vector<8x32xf32>
    %427 = math.exp %426 : vector<8x32xf32>
    %cst_94 = arith.constant 1.000000e+00 : f32
    %428 = vector.broadcast %cst_94 : f32 to vector<8x32xf32>
    %429 = arith.addf %428, %427 : vector<8x32xf32>
    %430 = arith.divf %428, %429 : vector<8x32xf32>
    %431 = arith.mulf %422, %405 : vector<8x32xf32>
    %432 = arith.mulf %416, %424 : vector<8x32xf32>
    %433 = arith.addf %431, %432 : vector<8x32xf32>
    %434 = math.tanh %433 : vector<8x32xf32>
    %435 = arith.mulf %430, %434 : vector<8x32xf32>
    %436 = vector.extract_strided_slice %265 {offsets = [48, 0], sizes = [8, 128], strides = [1, 1]} : vector<64x128xf32> to vector<8x128xf32>
    %cst_95 = arith.constant dense<0.000000e+00> : vector<8x128xf32>
    %437 = tpu.matmul %435, %260, %cst_95 {dimension_numbers = #tpu.dot_dimension_numbers<[1], [0], [0], [1], [0, 0, 1, 1], [], []>} : vector<8x32xf32>, vector<32x128xf32>, vector<8x128xf32> -> vector<8x128xf32>
    %438 = arith.addf %436, %437 : vector<8x128xf32>
    %439 = vector.extract_strided_slice %438 {offsets = [0, 0], sizes = [8, 32], strides = [1, 1]} : vector<8x128xf32> to vector<8x32xf32>
    %440 = arith.negf %439 : vector<8x32xf32>
    %441 = math.exp %440 : vector<8x32xf32>
    %cst_96 = arith.constant 1.000000e+00 : f32
    %442 = vector.broadcast %cst_96 : f32 to vector<8x32xf32>
    %443 = arith.addf %442, %441 : vector<8x32xf32>
    %444 = arith.divf %442, %443 : vector<8x32xf32>
    %445 = vector.extract_strided_slice %438 {offsets = [0, 32], sizes = [8, 32], strides = [1, 1]} : vector<8x128xf32> to vector<8x32xf32>
    %446 = arith.negf %445 : vector<8x32xf32>
    %447 = math.exp %446 : vector<8x32xf32>
    %cst_97 = arith.constant 1.000000e+00 : f32
    %448 = vector.broadcast %cst_97 : f32 to vector<8x32xf32>
    %449 = arith.addf %448, %447 : vector<8x32xf32>
    %450 = arith.divf %448, %449 : vector<8x32xf32>
    %451 = vector.extract_strided_slice %438 {offsets = [0, 64], sizes = [8, 32], strides = [1, 1]} : vector<8x128xf32> to vector<8x32xf32>
    %452 = math.tanh %451 : vector<8x32xf32>
    %453 = vector.extract_strided_slice %438 {offsets = [0, 96], sizes = [8, 32], strides = [1, 1]} : vector<8x128xf32> to vector<8x32xf32>
    %454 = arith.negf %453 : vector<8x32xf32>
    %455 = math.exp %454 : vector<8x32xf32>
    %cst_98 = arith.constant 1.000000e+00 : f32
    %456 = vector.broadcast %cst_98 : f32 to vector<8x32xf32>
    %457 = arith.addf %456, %455 : vector<8x32xf32>
    %458 = arith.divf %456, %457 : vector<8x32xf32>
    %459 = arith.mulf %450, %433 : vector<8x32xf32>
    %460 = arith.mulf %444, %452 : vector<8x32xf32>
    %461 = arith.addf %459, %460 : vector<8x32xf32>
    %462 = math.tanh %461 : vector<8x32xf32>
    %463 = arith.mulf %458, %462 : vector<8x32xf32>
    %464 = vector.extract_strided_slice %265 {offsets = [56, 0], sizes = [8, 128], strides = [1, 1]} : vector<64x128xf32> to vector<8x128xf32>
    %cst_99 = arith.constant dense<0.000000e+00> : vector<8x128xf32>
    %465 = tpu.matmul %463, %260, %cst_99 {dimension_numbers = #tpu.dot_dimension_numbers<[1], [0], [0], [1], [0, 0, 1, 1], [], []>} : vector<8x32xf32>, vector<32x128xf32>, vector<8x128xf32> -> vector<8x128xf32>
    %466 = arith.addf %464, %465 : vector<8x128xf32>
    %467 = vector.extract_strided_slice %466 {offsets = [0, 0], sizes = [8, 32], strides = [1, 1]} : vector<8x128xf32> to vector<8x32xf32>
    %468 = arith.negf %467 : vector<8x32xf32>
    %469 = math.exp %468 : vector<8x32xf32>
    %cst_100 = arith.constant 1.000000e+00 : f32
    %470 = vector.broadcast %cst_100 : f32 to vector<8x32xf32>
    %471 = arith.addf %470, %469 : vector<8x32xf32>
    %472 = arith.divf %470, %471 : vector<8x32xf32>
    %473 = vector.extract_strided_slice %466 {offsets = [0, 32], sizes = [8, 32], strides = [1, 1]} : vector<8x128xf32> to vector<8x32xf32>
    %474 = arith.negf %473 : vector<8x32xf32>
    %475 = math.exp %474 : vector<8x32xf32>
    %cst_101 = arith.constant 1.000000e+00 : f32
    %476 = vector.broadcast %cst_101 : f32 to vector<8x32xf32>
    %477 = arith.addf %476, %475 : vector<8x32xf32>
    %478 = arith.divf %476, %477 : vector<8x32xf32>
    %479 = vector.extract_strided_slice %466 {offsets = [0, 64], sizes = [8, 32], strides = [1, 1]} : vector<8x128xf32> to vector<8x32xf32>
    %480 = math.tanh %479 : vector<8x32xf32>
    %481 = vector.extract_strided_slice %466 {offsets = [0, 96], sizes = [8, 32], strides = [1, 1]} : vector<8x128xf32> to vector<8x32xf32>
    %482 = arith.negf %481 : vector<8x32xf32>
    %483 = math.exp %482 : vector<8x32xf32>
    %cst_102 = arith.constant 1.000000e+00 : f32
    %484 = vector.broadcast %cst_102 : f32 to vector<8x32xf32>
    %485 = arith.addf %484, %483 : vector<8x32xf32>
    %486 = arith.divf %484, %485 : vector<8x32xf32>
    %487 = arith.mulf %478, %461 : vector<8x32xf32>
    %488 = arith.mulf %472, %480 : vector<8x32xf32>
    %489 = arith.addf %487, %488 : vector<8x32xf32>
    %490 = math.tanh %489 : vector<8x32xf32>
    %491 = arith.mulf %486, %490 : vector<8x32xf32>
    %c0_103 = arith.constant 0 : index
    %c0_104 = arith.constant 0 : index
    %492 = vector.load %arg7[%c0_103, %c0_104] : memref<32x16xf32, #tpu.memory_space<vmem>>, vector<32x16xf32>
    %cst_105 = arith.constant dense<0.000000e+00> : vector<8x16xf32>
    %493 = tpu.matmul %491, %492, %cst_105 {dimension_numbers = #tpu.dot_dimension_numbers<[1], [0], [0], [1], [0, 0, 1, 1], [], []>} : vector<8x32xf32>, vector<32x16xf32>, vector<8x16xf32> -> vector<8x16xf32>
    %c0_106 = arith.constant 0 : index
    %c0_107 = arith.constant 0 : index
    %494 = vector.load %arg8[%c0_106, %c0_107] : memref<1x16xf32, #tpu.memory_space<vmem>>, vector<1x16xf32>
    %495 = vector.broadcast %494 : vector<1x16xf32> to vector<8x16xf32>
    %496 = arith.addf %493, %495 : vector<8x16xf32>
    %cst_108 = arith.constant 0.000000e+00 : f32
    %497 = vector.broadcast %cst_108 : f32 to vector<8x16xf32>
    %498 = arith.maximumf %496, %497 : vector<8x16xf32>
    %c0_109 = arith.constant 0 : index
    %c0_110 = arith.constant 0 : index
    %499 = vector.load %arg9[%c0_109, %c0_110] : memref<16x4xf32, #tpu.memory_space<vmem>>, vector<16x4xf32>
    %cst_111 = arith.constant dense<0.000000e+00> : vector<8x4xf32>
    %500 = tpu.matmul %498, %499, %cst_111 {dimension_numbers = #tpu.dot_dimension_numbers<[1], [0], [0], [1], [0, 0, 1, 1], [], []>} : vector<8x16xf32>, vector<16x4xf32>, vector<8x4xf32> -> vector<8x4xf32>
    %c0_112 = arith.constant 0 : index
    %c0_113 = arith.constant 0 : index
    %501 = vector.load %arg10[%c0_112, %c0_113] : memref<1x4xf32, #tpu.memory_space<vmem>>, vector<1x4xf32>
    %502 = vector.broadcast %501 : vector<1x4xf32> to vector<8x4xf32>
    %503 = arith.addf %500, %502 : vector<8x4xf32>
    %c0_114 = arith.constant 0 : index
    %c0_115 = arith.constant 0 : index
    %504 = vector.load %arg11[%c0_114, %c0_115] : memref<8x4xf32, #tpu.memory_space<vmem>>, vector<8x4xf32>
    tpu.vector_store %arg11[%c0_114, %c0_115], %503 {strides = array<i32>} : memref<8x4xf32, #tpu.memory_space<vmem>>, vector<8x4xf32>,
    return
  }
}

</mosaic_0001>

<llo_original>
// kernel: lstm_forecaster_forward.1
$region0: #{lstm_forecaster_forward.1}
  #allocation0 [shape = 'u32[]', space=smem, size = 0x4, offset = 0x4, fixed_abs, tag = 'smem constant byte address 0x4 - core index']
  #allocation1 [shape = 'u32[144,128]{1,0:T(1,128)}', space=vmem, size = 0x12000, scoped, tag = 'internal scratch']
  #allocation2 [shape = 'f32[8,8,32]{2,1,0:T(8,128)}', space=vmem, size = 0x8000, scoped, tag = 'scratch operand']
  %s0 = inlined_call_operand.vmem [shape: f32[8,8,8], index: 0, kind: input, shape index: {}]
  %s1 = inlined_call_operand.vmem [shape: f32[8,128], index: 1, kind: input, shape index: {}]
  %s2 = inlined_call_operand.vmem [shape: f32[32,128], index: 2, kind: input, shape index: {}]
  %s3 = inlined_call_operand.vmem [shape: f32[1,128], index: 3, kind: input, shape index: {}]
  %s4 = inlined_call_operand.vmem [shape: f32[32,128], index: 4, kind: input, shape index: {}]
  %s5 = inlined_call_operand.vmem [shape: f32[32,128], index: 5, kind: input, shape index: {}]
  %s6 = inlined_call_operand.vmem [shape: f32[1,128], index: 6, kind: input, shape index: {}]
  %s7 = inlined_call_operand.vmem [shape: f32[32,16], index: 7, kind: input, shape index: {}]
  %s8 = inlined_call_operand.vmem [shape: f32[1,16], index: 8, kind: input, shape index: {}]
  %s9 = inlined_call_operand.vmem [shape: f32[16,4], index: 9, kind: input, shape index: {}]
  %s10 = inlined_call_operand.vmem [shape: f32[1,4], index: 10, kind: input, shape index: {}]
  %s11 = inlined_call_operand.vmem [shape: f32[8,4], index: 11, kind: output, shape index: {}]
  %s12 = sld [smem:[#allocation0]]
  $region54: #{lstm_forecaster_forward.1} parent=0
    _
  %s14 = ssub.s32 1, %s12
  %s15 = scalar_select 0, %s14, %s12
  // Predicated region
  $region2: #{lstm_forecaster_forward.1} parent=0 // pred_check
    _
  $region3: #{lstm_forecaster_forward.1} parent=0 // pred_check_branch
    %17 = sbr.rel (0) target = $region5
  $region4: #{lstm_forecaster_forward.1} parent=0 // pred_region
    _
  $region5: #{lstm_forecaster_forward.1} parent=0 // pred_fallthru
    _
  // Predicated region
  $region6: #{lstm_forecaster_forward.1} parent=0 // pred_check
    _
  $region7: #{lstm_forecaster_forward.1} parent=0 // pred_check_branch
    %19 = sbr.rel (0) target = $region9
  $region8: #{lstm_forecaster_forward.1} parent=0 // pred_region
    _
  $region9: #{lstm_forecaster_forward.1} parent=0 // pred_fallthru
    _
  // Predicated region
  $region10: #{lstm_forecaster_forward.1} parent=0 // pred_check
    _
  $region11: #{lstm_forecaster_forward.1} parent=0 // pred_check_branch
    %21 = sbr.rel (0) target = $region13
  $region12: #{lstm_forecaster_forward.1} parent=0 // pred_region
    _
  $region13: #{lstm_forecaster_forward.1} parent=0 // pred_fallthru
    _
  // Predicated region
  $region14: #{lstm_forecaster_forward.1} parent=0 // pred_check
    _
  $region15: #{lstm_forecaster_forward.1} parent=0 // pred_check_branch
    %23 = sbr.rel (0) target = $region17
  $region16: #{lstm_forecaster_forward.1} parent=0 // pred_region
    _
  $region17: #{lstm_forecaster_forward.1} parent=0 // pred_fallthru
    _
  // Predicated region
  $region18: #{lstm_forecaster_forward.1} parent=0 // pred_check
    _
  $region19: #{lstm_forecaster_forward.1} parent=0 // pred_check_branch
    %25 = sbr.rel (0) target = $region21
  $region20: #{lstm_forecaster_forward.1} parent=0 // pred_region
    _
  $region21: #{lstm_forecaster_forward.1} parent=0 // pred_fallthru
    _
  // Predicated region
  $region22: #{lstm_forecaster_forward.1} parent=0 // pred_check
    _
  $region23: #{lstm_forecaster_forward.1} parent=0 // pred_check_branch
    %27 = sbr.rel (0) target = $region25
  $region24: #{lstm_forecaster_forward.1} parent=0 // pred_region
    _
  $region25: #{lstm_forecaster_forward.1} parent=0 // pred_fallthru
    _
  // Predicated region
  $region26: #{lstm_forecaster_forward.1} parent=0 // pred_check
    _
  $region27: #{lstm_forecaster_forward.1} parent=0 // pred_check_branch
    %29 = sbr.rel (0) target = $region29
  $region28: #{lstm_forecaster_forward.1} parent=0 // pred_region
    _
  $region29: #{lstm_forecaster_forward.1} parent=0 // pred_fallthru
    _
  // Predicated region
  $region30: #{lstm_forecaster_forward.1} parent=0 // pred_check
    _
  $region31: #{lstm_forecaster_forward.1} parent=0 // pred_check_branch
    %31 = sbr.rel (0) target = $region33
  $region32: #{lstm_forecaster_forward.1} parent=0 // pred_region
    _
  $region33: #{lstm_forecaster_forward.1} parent=0 // pred_fallthru
    _
  // Predicated region
  $region34: #{lstm_forecaster_forward.1} parent=0 // pred_check
    _
  $region35: #{lstm_forecaster_forward.1} parent=0 // pred_check_branch
    %33 = sbr.rel (0) target = $region37
  $region36: #{lstm_forecaster_forward.1} parent=0 // pred_region
    _
  $region37: #{lstm_forecaster_forward.1} parent=0 // pred_fallthru
    _
  // Predicated region
  $region38: #{lstm_forecaster_forward.1} parent=0 // pred_check
    _
  $region39: #{lstm_forecaster_forward.1} parent=0 // pred_check_branch
    %35 = sbr.rel (0) target = $region41
  $region40: #{lstm_forecaster_forward.1} parent=0 // pred_region
    _
  $region41: #{lstm_forecaster_forward.1} parent=0 // pred_fallthru
    _
  // Predicated region
  $region42: #{lstm_forecaster_forward.1} parent=0 // pred_check
    _
  $region43: #{lstm_forecaster_forward.1} parent=0 // pred_check_branch
    %37 = sbr.rel (0) target = $region45
  $region44: #{lstm_forecaster_forward.1} parent=0 // pred_region
    _
  $region45: #{lstm_forecaster_forward.1} parent=0 // pred_fallthru
    _
  %v38 = vld [vmem:[%s0] sm:$0xff]
  %v39 = vld [vmem:[%s0 + $0x8] sm:$0xff]
  %v40 = vld [vmem:[%s0 + $0x10] sm:$0xff]
  %v41 = vld [vmem:[%s0 + $0x18] sm:$0xff]
  %v42 = vld [vmem:[%s0 + $0x20] sm:$0xff]
  %v43 = vld [vmem:[%s0 + $0x28] sm:$0xff]
  %v44 = vld [vmem:[%s0 + $0x30] sm:$0xff]
  %v45 = vld [vmem:[%s0 + $0x38] sm:$0xff]
  %v46 = vld [vmem:[%s2] sm:$0xff]
  %v47 = vld [vmem:[%s2 + $0x8] sm:$0xff]
  %v48 = vld [vmem:[%s2 + $0x10] sm:$0xff]
  %v49 = vld [vmem:[%s2 + $0x18] sm:$0xff]
  %v50 = vld [vmem:[%s1] sm:$0xff]
  %v51 = vld [vmem:[%s3] sm:$0x1]
  %v53 = vlaneseq
  %v54 = vshrl.u32 %v53, 7
  %v55 = vsub.s32 0, %v54
  %v56 = vrot.slane %v51, %v55
  %vm58 = vcmask 64512
  %v60 = vsel %vm58, %v38, 0
  %v63 = vsel %vm58, %v39, 0
  %v66 = vsel %vm58, %v40, 0
  %v69 = vsel %vm58, %v41, 0
  %v72 = vsel %vm58, %v42, 0
  %v75 = vsel %vm58, %v43, 0
  %v78 = vsel %vm58, %v44, 0
  %v81 = vsel %vm58, %v45, 0
  %83 = vmatprep.subr.mxu0 0.0
  %84 = vmatpush1.msra.mxu0 0.0
  %85 = vmatprep.subr.mxu0 0.0
  %86 = vmatpush1.msra.mxu0 0.0
  %87 = vmatprep.subr.mxu0 0.0
  %88 = vmatpush1.msra.mxu0 0.0
  %89 = vmatprep.subr.mxu0 0.0
  %90 = vmatpush1.msra.mxu0 0.0
  %91 = vmatprep.subr.mxu0 0.0
  %92 = vmatpush1.msra.mxu0 0.0
  %93 = vmatprep.subr.mxu0 0.0
  %94 = vmatpush1.msra.mxu0 0.0
  %95 = vmatprep.subr.mxu0 0.0
  %96 = vmatpush1.msra.mxu0 0.0
  %97 = vmatprep.subr.mxu0 0.0
  %98 = vmatpush1.msra.mxu0 0.0
  %99 = vmatprep.subr.mxu0 0.0
  %100 = vmatpush1.msra.mxu0 0.0
  %101 = vmatprep.subr.mxu0 0.0
  %102 = vmatpush1.msra.mxu0 0.0
  %103 = vmatprep.subr.mxu0 0.0
  %104 = vmatpush1.msra.mxu0 0.0
  %105 = vmatprep.subr.mxu0 0.0
  %106 = vmatpush1.msra.mxu0 0.0
  %107 = vmatprep.subr.mxu0 0.0
  %108 = vmatpush1.msra.mxu0 0.0
  %109 = vmatprep.subr.mxu0 0.0
  %110 = vmatpush1.msra.mxu0 0.0
  %111 = vmatprep.subr.mxu0 0.0
  %112 = vmatpush1.msra.mxu0 0.0
  %113 = vmatprep.subr.mxu0 0.0
  %114 = vmatpush1.msra.mxu0 %v50
  %115 = vmatprep.subr.mxu0 0.0
  %116 = vmatpush2.msra.mxu0 0.0
  %117 = vmatprep.subr.mxu0 0.0
  %118 = vmatpush2.msra.mxu0 0.0
  %119 = vmatprep.subr.mxu0 0.0
  %120 = vmatpush2.msra.mxu0 0.0
  %121 = vmatprep.subr.mxu0 0.0
  %122 = vmatpush2.msra.mxu0 0.0
  %123 = vmatprep.subr.mxu0 0.0
  %124 = vmatpush2.msra.mxu0 0.0
  %125 = vmatprep.subr.mxu0 0.0
  %126 = vmatpush2.msra.mxu0 0.0
  %127 = vmatprep.subr.mxu0 0.0
  %128 = vmatpush2.msra.mxu0 0.0
  %129 = vmatprep.subr.mxu0 0.0
  %130 = vmatpush2.msra.mxu0 0.0
  %131 = vmatprep.subr.mxu0 0.0
  %132 = vmatpush2.msra.mxu0 0.0
  %133 = vmatprep.subr.mxu0 0.0
  %134 = vmatpush2.msra.mxu0 0.0
  %135 = vmatprep.subr.mxu0 0.0
  %136 = vmatpush2.msra.mxu0 0.0
  %137 = vmatprep.subr.mxu0 0.0
  %138 = vmatpush2.msra.mxu0 0.0
  %139 = vmatprep.subr.mxu0 0.0
  %140 = vmatpush2.msra.mxu0 0.0
  %141 = vmatprep.subr.mxu0 0.0
  %142 = vmatpush2.msra.mxu0 0.0
  %143 = vmatprep.subr.mxu0 0.0
  %144 = vmatpush2.msra.mxu0 0.0
  %145 = vmatprep.subr.mxu0 0.0
  %146 = vmatpush2.msra.mxu0 0.0
  %147 = vmatprep.mubr.f32.mxu0 0.0
  %148 = vmatmul.mubr.f32.gmra.mxu0 %v60
  %v149 = vpop.f32.mrf.mxu0
  %v150 = vadd.f32 %v56, %v149
  %v151 = vpop.f32.mrf.mxu0
  %152 = vmatprep.mubr.f32.mxu0 0.0
  %153 = vmatmul.mubr.f32.gmra.mxu0 %v63
  %v154 = vpop.f32.mrf.mxu0
  %v155 = vadd.f32 %v56, %v154
  %v156 = vpop.f32.mrf.mxu0
  %157 = vmatprep.mubr.f32.mxu0 0.0
  %158 = vmatmul.mubr.f32.gmra.mxu0 %v66
  %v159 = vpop.f32.mrf.mxu0
  %v160 = vadd.f32 %v56, %v159
  %v161 = vpop.f32.mrf.mxu0
  %162 = vmatprep.mubr.f32.mxu0 0.0
  %163 = vmatmul.mubr.f32.gmra.mxu0 %v69
  %v164 = vpop.f32.mrf.mxu0
  %v165 = vadd.f32 %v56, %v164
  %v166 = vpop.f32.mrf.mxu0
  %167 = vmatprep.mubr.f32.mxu0 0.0
  %168 = vmatmul.mubr.f32.gmra.mxu0 %v72
  %v169 = vpop.f32.mrf.mxu0
  %v170 = vadd.f32 %v56, %v169
  %v171 = vpop.f32.mrf.mxu0
  %172 = vmatprep.mubr.f32.mxu0 0.0
  %173 = vmatmul.mubr.f32.gmra.mxu0 %v75
  %v174 = vpop.f32.mrf.mxu0
  %v175 = vadd.f32 %v56, %v174
  %v176 = vpop.f32.mrf.mxu0
  %177 = vmatprep.mubr.f32.mxu0 0.0
  %178 = vmatmul.mubr.f32.gmra.mxu0 %v78
  %v179 = vpop.f32.mrf.mxu0
  %v180 = vadd.f32 %v56, %v179
  %v181 = vpop.f32.mrf.mxu0
  %182 = vmatprep.mubr.f32.mxu0 0.0
  %183 = vmatmul.mubr.f32.gmra.mxu0 %v81
  %v184 = vpop.f32.mrf.mxu0
  %v185 = vadd.f32 %v56, %v184
  %v186 = vpop.f32.mrf.mxu0
  %187 = vdwg.mxu0
  %vm188 = vcmask 261120
  %v190 = vsel %vm188, 0.0, 0
  %192 = vmatprep.subr.mxu0 0.0
  %193 = vmatpush1.msra.mxu0 0.0
  %194 = vmatprep.subr.mxu0 0.0
  %195 = vmatpush1.msra.mxu0 0.0
  %196 = vmatprep.subr.mxu0 0.0
  %197 = vmatpush1.msra.mxu0 0.0
  %198 = vmatprep.subr.mxu0 0.0
  %199 = vmatpush1.msra.mxu0 0.0
  %200 = vmatprep.subr.mxu0 0.0
  %201 = vmatpush1.msra.mxu0 0.0
  %202 = vmatprep.subr.mxu0 0.0
  %203 = vmatpush1.msra.mxu0 0.0
  %204 = vmatprep.subr.mxu0 0.0
  %205 = vmatpush1.msra.mxu0 0.0
  %206 = vmatprep.subr.mxu0 0.0
  %207 = vmatpush1.msra.mxu0 0.0
  %208 = vmatprep.subr.mxu0 0.0
  %209 = vmatpush1.msra.mxu0 0.0
  %210 = vmatprep.subr.mxu0 0.0
  %211 = vmatpush1.msra.mxu0 0.0
  %212 = vmatprep.subr.mxu0 0.0
  %213 = vmatpush1.msra.mxu0 0.0
  %214 = vmatprep.subr.mxu0 0.0
  %215 = vmatpush1.msra.mxu0 0.0
  %216 = vmatprep.subr.mxu0 0.0
  %217 = vmatpush1.msra.mxu0 %v49
  %218 = vmatprep.subr.mxu0 0.0
  %219 = vmatpush1.msra.mxu0 %v48
  %220 = vmatprep.subr.mxu0 0.0
  %221 = vmatpush1.msra.mxu0 %v47
  %222 = vmatprep.subr.mxu0 0.0
  %223 = vmatpush1.msra.mxu0 %v46
  %224 = vmatprep.subr.mxu0 0.0
  %225 = vmatpush2.msra.mxu0 0.0
  %226 = vmatprep.subr.mxu0 0.0
  %227 = vmatpush2.msra.mxu0 0.0
  %228 = vmatprep.subr.mxu0 0.0
  %229 = vmatpush2.msra.mxu0 0.0
  %230 = vmatprep.subr.mxu0 0.0
  %231 = vmatpush2.msra.mxu0 0.0
  %232 = vmatprep.subr.mxu0 0.0
  %233 = vmatpush2.msra.mxu0 0.0
  %234 = vmatprep.subr.mxu0 0.0
  %235 = vmatpush2.msra.mxu0 0.0
  %236 = vmatprep.subr.mxu0 0.0
  %237 = vmatpush2.msra.mxu0 0.0
  %238 = vmatprep.subr.mxu0 0.0
  %239 = vmatpush2.msra.mxu0 0.0
  %240 = vmatprep.subr.mxu0 0.0
  %241 = vmatpush2.msra.mxu0 0.0
  %242 = vmatprep.subr.mxu0 0.0
  %243 = vmatpush2.msra.mxu0 0.0
  %244 = vmatprep.subr.mxu0 0.0
  %245 = vmatpush2.msra.mxu0 0.0
  %246 = vmatprep.subr.mxu0 0.0
  %247 = vmatpush2.msra.mxu0 0.0
  %248 = vmatprep.subr.mxu0 0.0
  %249 = vmatpush2.msra.mxu0 0.0
  %250 = vmatprep.subr.mxu0 0.0
  %251 = vmatpush2.msra.mxu0 0.0
  %252 = vmatprep.subr.mxu0 0.0
  %253 = vmatpush2.msra.mxu0 0.0
  %254 = vmatprep.subr.mxu0 0.0
  %255 = vmatpush2.msra.mxu0 0.0
  %256 = vmatprep.mubr.f32.mxu0 0.0
  %257 = vmatmul.mubr.f32.gmra.mxu0 %v190
  %v258 = vpop.f32.mrf.mxu0
  %v259 = vadd.f32 0.0, %v258
  %v260 = vpop.f32.mrf.mxu0
  %261 = vdwg.mxu0
  %v262 = vadd.f32 %v150, %v259
  %v263 = vxor.u32 %v262, 2147483648
  %v264 = vmul.f32 %v263, 1.442695
  %v265 = vpow.pop %v264
  %v266 = vadd.f32 %v265, 1.0
  %v267 = vrcp.pop %v266
  %v268 = vmul.f32 1.0, %v267
  %v269 = vtanh.pop %v262
  %v270 = vmul.f32 %v268, 0.0
  %272 = vrot.lane.b32.xlu0 %v269, 64
  %v273 = vpop.permute.xlu0 %272
  %v275 = vmul.f32 %v268, %v273
  %277 = vrot.lane.b32.xlu0 %v275, 32
  %v278 = vpop.permute.xlu0 %277
  %v280 = vadd.f32 %v270, %v278
  %v281 = vtanh.pop %v280
  %283 = vrot.lane.b32.xlu0 %v281, 64
  %v284 = vpop.permute.xlu0 %283
  %v286 = vmul.f32 %v268, %v284
  %288 = vrot.lane.b32.xlu0 %v286, 32
  %v289 = vpop.permute.xlu0 %288
  %291 = vst.msk [vmem:[#allocation2] sm:$0xff] %vm188, %v289
  %v292 = vsel %vm188, %v289, 0
  %294 = vmatprep.subr.mxu0 0.0
  %295 = vmatpush1.msra.mxu0 0.0
  %296 = vmatprep.subr.mxu0 0.0
  %297 = vmatpush1.msra.mxu0 0.0
  %298 = vmatprep.subr.mxu0 0.0
  %299 = vmatpush1.msra.mxu0 0.0
  %300 = vmatprep.subr.mxu0 0.0
  %301 = vmatpush1.msra.mxu0 0.0
  %302 = vmatprep.subr.mxu0 0.0
  %303 = vmatpush1.msra.mxu0 0.0
  %304 = vmatprep.subr.mxu0 0.0
  %305 = vmatpush1.msra.mxu0 0.0
  %306 = vmatprep.subr.mxu0 0.0
  %307 = vmatpush1.msra.mxu0 0.0
  %308 = vmatprep.subr.mxu0 0.0
  %309 = vmatpush1.msra.mxu0 0.0
  %310 = vmatprep.subr.mxu0 0.0
  %311 = vmatpush1.msra.mxu0 0.0
  %312 = vmatprep.subr.mxu0 0.0
  %313 = vmatpush1.msra.mxu0 0.0
  %314 = vmatprep.subr.mxu0 0.0
  %315 = vmatpush1.msra.mxu0 0.0
  %316 = vmatprep.subr.mxu0 0.0
  %317 = vmatpush1.msra.mxu0 0.0
  %318 = vmatprep.subr.mxu0 0.0
  %319 = vmatpush1.msra.mxu0 %v49
  %320 = vmatprep.subr.mxu0 0.0
  %321 = vmatpush1.msra.mxu0 %v48
  %322 = vmatprep.subr.mxu0 0.0
  %323 = vmatpush1.msra.mxu0 %v47
  %324 = vmatprep.subr.mxu0 0.0
  %325 = vmatpush1.msra.mxu0 %v46
  %326 = vmatprep.subr.mxu0 0.0
  %327 = vmatpush2.msra.mxu0 0.0
  %328 = vmatprep.subr.mxu0 0.0
  %329 = vmatpush2.msra.mxu0 0.0
  %330 = vmatprep.subr.mxu0 0.0
  %331 = vmatpush2.msra.mxu0 0.0
  %332 = vmatprep.subr.mxu0 0.0
  %333 = vmatpush2.msra.mxu0 0.0
  %334 = vmatprep.subr.mxu0 0.0
  %335 = vmatpush2.msra.mxu0 0.0
  %336 = vmatprep.subr.mxu0 0.0
  %337 = vmatpush2.msra.mxu0 0.0
  %338 = vmatprep.subr.mxu0 0.0
  %339 = vmatpush2.msra.mxu0 0.0
  %340 = vmatprep.subr.mxu0 0.0
  %341 = vmatpush2.msra.mxu0 0.0
  %342 = vmatprep.subr.mxu0 0.0
  %343 = vmatpush2.msra.mxu0 0.0
  %344 = vmatprep.subr.mxu0 0.0
  %345 = vmatpush2.msra.mxu0 0.0
  %346 = vmatprep.subr.mxu0 0.0
  %347 = vmatpush2.msra.mxu0 0.0
  %348 = vmatprep.subr.mxu0 0.0
  %349 = vmatpush2.msra.mxu0 0.0
  %350 = vmatprep.subr.mxu0 0.0
  %351 = vmatpush2.msra.mxu0 0.0
  %352 = vmatprep.subr.mxu0 0.0
  %353 = vmatpush2.msra.mxu0 0.0
  %354 = vmatprep.subr.mxu0 0.0
  %355 = vmatpush2.msra.mxu0 0.0
  %356 = vmatprep.subr.mxu0 0.0
  %357 = vmatpush2.msra.mxu0 0.0
  %358 = vmatprep.mubr.f32.mxu0 0.0
  %359 = vmatmul.mubr.f32.gmra.mxu0 %v292
  %v360 = vpop.f32.mrf.mxu0
  %v361 = vadd.f32 0.0, %v360
  %v362 = vpop.f32.mrf.mxu0
  %363 = vdwg.mxu0
  %v364 = vadd.f32 %v155, %v361
  %v365 = vxor.u32 %v364, 2147483648
  %v366 = vmul.f32 %v365, 1.442695
  %v367 = vpow.pop %v366
  %v368 = vadd.f32 %v367, 1.0
  %v369 = vrcp.pop %v368
  %v370 = vmul.f32 1.0, %v369
  %v371 = vtanh.pop %v364
  %v372 = vmul.f32 %v370, %v280
  %374 = vrot.lane.b32.xlu0 %v371, 64
  %v375 = vpop.permute.xlu0 %374
  %v377 = vmul.f32 %v370, %v375
  %379 = vrot.lane.b32.xlu0 %v377, 32
  %v380 = vpop.permute.xlu0 %379
  %v382 = vadd.f32 %v372, %v380
  %v383 = vtanh.pop %v382
  %385 = vrot.lane.b32.xlu0 %v383, 64
  %v386 = vpop.permute.xlu0 %385
  %v388 = vmul.f32 %v370, %v386
  %390 = vrot.lane.b32.xlu0 %v388, 32
  %v391 = vpop.permute.xlu0 %390
  %s393 = scalar_lea.vmem [#allocation2], 8
  %394 = vst.msk [vmem:[%s393] sm:$0xff] %vm188, %v391
  %v395 = vsel %vm188, %v391, 0
  %397 = vmatprep.subr.mxu0 0.0
  %398 = vmatpush1.msra.mxu0 0.0
  %399 = vmatprep.subr.mxu0 0.0
  %400 = vmatpush1.msra.mxu0 0.0
  %401 = vmatprep.subr.mxu0 0.0
  %402 = vmatpush1.msra.mxu0 0.0
  %403 = vmatprep.subr.mxu0 0.0
  %404 = vmatpush1.msra.mxu0 0.0
  %405 = vmatprep.subr.mxu0 0.0
  %406 = vmatpush1.msra.mxu0 0.0
  %407 = vmatprep.subr.mxu0 0.0
  %408 = vmatpush1.msra.mxu0 0.0
  %409 = vmatprep.subr.mxu0 0.0
  %410 = vmatpush1.msra.mxu0 0.0
  %411 = vmatprep.subr.mxu0 0.0
  %412 = vmatpush1.msra.mxu0 0.0
  %413 = vmatprep.subr.mxu0 0.0
  %414 = vmatpush1.msra.mxu0 0.0
  %415 = vmatprep.subr.mxu0 0.0
  %416 = vmatpush1.msra.mxu0 0.0
  %417 = vmatprep.subr.mxu0 0.0
  %418 = vmatpush1.msra.mxu0 0.0
  %419 = vmatprep.subr.mxu0 0.0
  %420 = vmatpush1.msra.mxu0 0.0
  %421 = vmatprep.subr.mxu0 0.0
  %422 = vmatpush1.msra.mxu0 %v49
  %423 = vmatprep.subr.mxu0 0.0
  %424 = vmatpush1.msra.mxu0 %v48
  %425 = vmatprep.subr.mxu0 0.0
  %426 = vmatpush1.msra.mxu0 %v47
  %427 = vmatprep.subr.mxu0 0.0
  %428 = vmatpush1.msra.mxu0 %v46
  %429 = vmatprep.subr.mxu0 0.0
  %430 = vmatpush2.msra.mxu0 0.0
  %431 = vmatprep.subr.mxu0 0.0
  %432 = vmatpush2.msra.mxu0 0.0
  %433 = vmatprep.subr.mxu0 0.0
  %434 = vmatpush2.msra.mxu0 0.0
  %435 = vmatprep.subr.mxu0 0.0
  %436 = vmatpush2.msra.mxu0 0.0
  %437 = vmatprep.subr.mxu0 0.0
  %438 = vmatpush2.msra.mxu0 0.0
  %439 = vmatprep.subr.mxu0 0.0
  %440 = vmatpush2.msra.mxu0 0.0
  %441 = vmatprep.subr.mxu0 0.0
  %442 = vmatpush2.msra.mxu0 0.0
  %443 = vmatprep.subr.mxu0 0.0
  %444 = vmatpush2.msra.mxu0 0.0
  %445 = vmatprep.subr.mxu0 0.0
  %446 = vmatpush2.msra.mxu0 0.0
  %447 = vmatprep.subr.mxu0 0.0
  %448 = vmatpush2.msra.mxu0 0.0
  %449 = vmatprep.subr.mxu0 0.0
  %450 = vmatpush2.msra.mxu0 0.0
  %451 = vmatprep.subr.mxu0 0.0
  %452 = vmatpush2.msra.mxu0 0.0
  %453 = vmatprep.subr.mxu0 0.0
  %454 = vmatpush2.msra.mxu0 0.0
  %455 = vmatprep.subr.mxu0 0.0
  %456 = vmatpush2.msra.mxu0 0.0
  %457 = vmatprep.subr.mxu0 0.0
  %458 = vmatpush2.msra.mxu0 0.0
  %459 = vmatprep.subr.mxu0 0.0
  %460 = vmatpush2.msra.mxu0 0.0
  %461 = vmatprep.mubr.f32.mxu0 0.0
  %462 = vmatmul.mubr.f32.gmra.mxu0 %v395
  %v463 = vpop.f32.mrf.mxu0
  %v464 = vadd.f32 0.0, %v463
  %v465 = vpop.f32.mrf.mxu0
  %466 = vdwg.mxu0
  %v467 = vadd.f32 %v160, %v464
  %v468 = vxor.u32 %v467, 2147483648
  %v469 = vmul.f32 %v468, 1.442695
  %v470 = vpow.pop %v469
  %v471 = vadd.f32 %v470, 1.0
  %v472 = vrcp.pop %v471
  %v473 = vmul.f32 1.0, %v472
  %v474 = vtanh.pop %v467
  %v475 = vmul.f32 %v473, %v382
  %477 = vrot.lane.b32.xlu0 %v474, 64
  %v478 = vpop.permute.xlu0 %477
  %v480 = vmul.f32 %v473, %v478
  %482 = vrot.lane.b32.xlu0 %v480, 32
  %v483 = vpop.permute.xlu0 %482
  %v485 = vadd.f32 %v475, %v483
  %v486 = vtanh.pop %v485
  %488 = vrot.lane.b32.xlu0 %v486, 64
  %v489 = vpop.permute.xlu0 %488
  %v491 = vmul.f32 %v473, %v489
  %493 = vrot.lane.b32.xlu0 %v491, 32
  %v494 = vpop.permute.xlu0 %493
  %s496 = scalar_lea.vmem [#allocation2], 16
  %497 = vst.msk [vmem:[%s496] sm:$0xff] %vm188, %v494
  %v498 = vsel %vm188, %v494, 0
  %500 = vmatprep.subr.mxu0 0.0
  %501 = vmatpush1.msra.mxu0 0.0
  %502 = vmatprep.subr.mxu0 0.0
  %503 = vmatpush1.msra.mxu0 0.0
  %504 = vmatprep.subr.mxu0 0.0
  %505 = vmatpush1.msra.mxu0 0.0
  %506 = vmatprep.subr.mxu0 0.0
  %507 = vmatpush1.msra.mxu0 0.0
  %508 = vmatprep.subr.mxu0 0.0
  %509 = vmatpush1.msra.mxu0 0.0
  %510 = vmatprep.subr.mxu0 0.0
  %511 = vmatpush1.msra.mxu0 0.0
  %512 = vmatprep.subr.mxu0 0.0
  %513 = vmatpush1.msra.mxu0 0.0
  %514 = vmatprep.subr.mxu0 0.0
  %515 = vmatpush1.msra.mxu0 0.0
  %516 = vmatprep.subr.mxu0 0.0
  %517 = vmatpush1.msra.mxu0 0.0
  %518 = vmatprep.subr.mxu0 0.0
  %519 = vmatpush1.msra.mxu0 0.0
  %520 = vmatprep.subr.mxu0 0.0
  %521 = vmatpush1.msra.mxu0 0.0
  %522 = vmatprep.subr.mxu0 0.0
  %523 = vmatpush1.msra.mxu0 0.0
  %524 = vmatprep.subr.mxu0 0.0
  %525 = vmatpush1.msra.mxu0 %v49
  %526 = vmatprep.subr.mxu0 0.0
  %527 = vmatpush1.msra.mxu0 %v48
  %528 = vmatprep.subr.mxu0 0.0
  %529 = vmatpush1.msra.mxu0 %v47
  %530 = vmatprep.subr.mxu0 0.0
  %531 = vmatpush1.msra.mxu0 %v46
  %532 = vmatprep.subr.mxu0 0.0
  %533 = vmatpush2.msra.mxu0 0.0
  %534 = vmatprep.subr.mxu0 0.0
  %535 = vmatpush2.msra.mxu0 0.0
  %536 = vmatprep.subr.mxu0 0.0
  %537 = vmatpush2.msra.mxu0 0.0
  %538 = vmatprep.subr.mxu0 0.0
  %539 = vmatpush2.msra.mxu0 0.0
  %540 = vmatprep.subr.mxu0 0.0
  %541 = vmatpush2.msra.mxu0 0.0
  %542 = vmatprep.subr.mxu0 0.0
  %543 = vmatpush2.msra.mxu0 0.0
  %544 = vmatprep.subr.mxu0 0.0
  %545 = vmatpush2.msra.mxu0 0.0
  %546 = vmatprep.subr.mxu0 0.0
  %547 = vmatpush2.msra.mxu0 0.0
  %548 = vmatprep.subr.mxu0 0.0
  %549 = vmatpush2.msra.mxu0 0.0
  %550 = vmatprep.subr.mxu0 0.0
  %551 = vmatpush2.msra.mxu0 0.0
  %552 = vmatprep.subr.mxu0 0.0
  %553 = vmatpush2.msra.mxu0 0.0
  %554 = vmatprep.subr.mxu0 0.0
  %555 = vmatpush2.msra.mxu0 0.0
  %556 = vmatprep.subr.mxu0 0.0
  %557 = vmatpush2.msra.mxu0 0.0
  %558 = vmatprep.subr.mxu0 0.0
  %559 = vmatpush2.msra.mxu0 0.0
  %560 = vmatprep.subr.mxu0 0.0
  %561 = vmatpush2.msra.mxu0 0.0
  %562 = vmatprep.subr.mxu0 0.0
  %563 = vmatpush2.msra.mxu0 0.0
  %564 = vmatprep.mubr.f32.mxu0 0.0
  %565 = vmatmul.mubr.f32.gmra.mxu0 %v498
  %v566 = vpop.f32.mrf.mxu0
  %v567 = vadd.f32 0.0, %v566
  %v568 = vpop.f32.mrf.mxu0
  %569 = vdwg.mxu0
  %v570 = vadd.f32 %v165, %v567
  %v571 = vxor.u32 %v570, 2147483648
  %v572 = vmul.f32 %v571, 1.442695
  %v573 = vpow.pop %v572
  %v574 = vadd.f32 %v573, 1.0
  %v575 = vrcp.pop %v574
  %v576 = vmul.f32 1.0, %v575
  %v577 = vtanh.pop %v570
  %v578 = vmul.f32 %v576, %v485
  %580 = vrot.lane.b32.xlu0 %v577, 64
  %v581 = vpop.permute.xlu0 %580
  %v583 = vmul.f32 %v576, %v581
  %585 = vrot.lane.b32.xlu0 %v583, 32
  %v586 = vpop.permute.xlu0 %585
  %v588 = vadd.f32 %v578, %v586
  %v589 = vtanh.pop %v588
  %591 = vrot.lane.b32.xlu0 %v589, 64
  %v592 = vpop.permute.xlu0 %591
  %v594 = vmul.f32 %v576, %v592
  %596 = vrot.lane.b32.xlu0 %v594, 32
  %v597 = vpop.permute.xlu0 %596
  %s599 = scalar_lea.vmem [#allocation2], 24
  %600 = vst.msk [vmem:[%s599] sm:$0xff] %vm188, %v597
  %v601 = vsel %vm188, %v597, 0
  %603 = vmatprep.subr.mxu0 0.0
  %604 = vmatpush1.msra.mxu0 0.0
  %605 = vmatprep.subr.mxu0 0.0
  %606 = vmatpush1.msra.mxu0 0.0
  %607 = vmatprep.subr.mxu0 0.0
  %608 = vmatpush1.msra.mxu0 0.0
  %609 = vmatprep.subr.mxu0 0.0
  %610 = vmatpush1.msra.mxu0 0.0
  %611 = vmatprep.subr.mxu0 0.0
  %612 = vmatpush1.msra.mxu0 0.0
  %613 = vmatprep.subr.mxu0 0.0
  %614 = vmatpush1.msra.mxu0 0.0
  %615 = vmatprep.subr.mxu0 0.0
  %616 = vmatpush1.msra.mxu0 0.0
  %617 = vmatprep.subr.mxu0 0.0
  %618 = vmatpush1.msra.mxu0 0.0
  %619 = vmatprep.subr.mxu0 0.0
  %620 = vmatpush1.msra.mxu0 0.0
  %621 = vmatprep.subr.mxu0 0.0
  %622 = vmatpush1.msra.mxu0 0.0
  %623 = vmatprep.subr.mxu0 0.0
  %624 = vmatpush1.msra.mxu0 0.0
  %625 = vmatprep.subr.mxu0 0.0
  %626 = vmatpush1.msra.mxu0 0.0
  %627 = vmatprep.subr.mxu0 0.0
  %628 = vmatpush1.msra.mxu0 %v49
  %629 = vmatprep.subr.mxu0 0.0
  %630 = vmatpush1.msra.mxu0 %v48
  %631 = vmatprep.subr.mxu0 0.0
  %632 = vmatpush1.msra.mxu0 %v47
  %633 = vmatprep.subr.mxu0 0.0
  %634 = vmatpush1.msra.mxu0 %v46
  %635 = vmatprep.subr.mxu0 0.0
  %636 = vmatpush2.msra.mxu0 0.0
  %637 = vmatprep.subr.mxu0 0.0
  %638 = vmatpush2.msra.mxu0 0.0
  %639 = vmatprep.subr.mxu0 0.0
  %640 = vmatpush2.msra.mxu0 0.0
  %641 = vmatprep.subr.mxu0 0.0
  %642 = vmatpush2.msra.mxu0 0.0
  %643 = vmatprep.subr.mxu0 0.0
  %644 = vmatpush2.msra.mxu0 0.0
  %645 = vmatprep.subr.mxu0 0.0
  %646 = vmatpush2.msra.mxu0 0.0
  %647 = vmatprep.subr.mxu0 0.0
  %648 = vmatpush2.msra.mxu0 0.0
  %649 = vmatprep.subr.mxu0 0.0
  %650 = vmatpush2.msra.mxu0 0.0
  %651 = vmatprep.subr.mxu0 0.0
  %652 = vmatpush2.msra.mxu0 0.0
  %653 = vmatprep.subr.mxu0 0.0
  %654 = vmatpush2.msra.mxu0 0.0
  %655 = vmatprep.subr.mxu0 0.0
  %656 = vmatpush2.msra.mxu0 0.0
  %657 = vmatprep.subr.mxu0 0.0
  %658 = vmatpush2.msra.mxu0 0.0
  %659 = vmatprep.subr.mxu0 0.0
  %660 = vmatpush2.msra.mxu0 0.0
  %661 = vmatprep.subr.mxu0 0.0
  %662 = vmatpush2.msra.mxu0 0.0
  %663 = vmatprep.subr.mxu0 0.0
  %664 = vmatpush2.msra.mxu0 0.0
  %665 = vmatprep.subr.mxu0 0.0
  %666 = vmatpush2.msra.mxu0 0.0
  %667 = vmatprep.mubr.f32.mxu0 0.0
  %668 = vmatmul.mubr.f32.gmra.mxu0 %v601
  %v669 = vpop.f32.mrf.mxu0
  %v670 = vadd.f32 0.0, %v669
  %v671 = vpop.f32.mrf.mxu0
  %672 = vdwg.mxu0
  %v673 = vadd.f32 %v170, %v670
  %v674 = vxor.u32 %v673, 2147483648
  %v675 = vmul.f32 %v674, 1.442695
  %v676 = vpow.pop %v675
  %v677 = vadd.f32 %v676, 1.0
  %v678 = vrcp.pop %v677
  %v679 = vmul.f32 1.0, %v678
  %v680 = vtanh.pop %v673
  %v681 = vmul.f32 %v679, %v588
  %683 = vrot.lane.b32.xlu0 %v680, 64
  %v684 = vpop.permute.xlu0 %683
  %v686 = vmul.f32 %v679, %v684
  %688 = vrot.lane.b32.xlu0 %v686, 32
  %v689 = vpop.permute.xlu0 %688
  %v691 = vadd.f32 %v681, %v689
  %v692 = vtanh.pop %v691
  %694 = vrot.lane.b32.xlu0 %v692, 64
  %v695 = vpop.permute.xlu0 %694
  %v697 = vmul.f32 %v679, %v695
  %699 = vrot.lane.b32.xlu0 %v697, 32
  %v700 = vpop.permute.xlu0 %699
  %s702 = scalar_lea.vmem [#allocation2], 32
  %703 = vst.msk [vmem:[%s702] sm:$0xff] %vm188, %v700
  %v704 = vsel %vm188, %v700, 0
  %706 = vmatprep.subr.mxu0 0.0
  %707 = vmatpush1.msra.mxu0 0.0
  %708 = vmatprep.subr.mxu0 0.0
  %709 = vmatpush1.msra.mxu0 0.0
  %710 = vmatprep.subr.mxu0 0.0
  %711 = vmatpush1.msra.mxu0 0.0
  %712 = vmatprep.subr.mxu0 0.0
  %713 = vmatpush1.msra.mxu0 0.0
  %714 = vmatprep.subr.mxu0 0.0
  %715 = vmatpush1.msra.mxu0 0.0
  %716 = vmatprep.subr.mxu0 0.0
  %717 = vmatpush1.msra.mxu0 0.0
  %718 = vmatprep.subr.mxu0 0.0
  %719 = vmatpush1.msra.mxu0 0.0
  %720 = vmatprep.subr.mxu0 0.0
  %721 = vmatpush1.msra.mxu0 0.0
  %722 = vmatprep.subr.mxu0 0.0
  %723 = vmatpush1.msra.mxu0 0.0
  %724 = vmatprep.subr.mxu0 0.0
  %725 = vmatpush1.msra.mxu0 0.0
  %726 = vmatprep.subr.mxu0 0.0
  %727 = vmatpush1.msra.mxu0 0.0
  %728 = vmatprep.subr.mxu0 0.0
  %729 = vmatpush1.msra.mxu0 0.0
  %730 = vmatprep.subr.mxu0 0.0
  %731 = vmatpush1.msra.mxu0 %v49
  %732 = vmatprep.subr.mxu0 0.0
  %733 = vmatpush1.msra.mxu0 %v48
  %734 = vmatprep.subr.mxu0 0.0
  %735 = vmatpush1.msra.mxu0 %v47
  %736 = vmatprep.subr.mxu0 0.0
  %737 = vmatpush1.msra.mxu0 %v46
  %738 = vmatprep.subr.mxu0 0.0
  %739 = vmatpush2.msra.mxu0 0.0
  %740 = vmatprep.subr.mxu0 0.0
  %741 = vmatpush2.msra.mxu0 0.0
  %742 = vmatprep.subr.mxu0 0.0
  %743 = vmatpush2.msra.mxu0 0.0
  %744 = vmatprep.subr.mxu0 0.0
  %745 = vmatpush2.msra.mxu0 0.0
  %746 = vmatprep.subr.mxu0 0.0
  %747 = vmatpush2.msra.mxu0 0.0
  %748 = vmatprep.subr.mxu0 0.0
  %749 = vmatpush2.msra.mxu0 0.0
  %750 = vmatprep.subr.mxu0 0.0
  %751 = vmatpush2.msra.mxu0 0.0
  %752 = vmatprep.subr.mxu0 0.0
  %753 = vmatpush2.msra.mxu0 0.0
  %754 = vmatprep.subr.mxu0 0.0
  %755 = vmatpush2.msra.mxu0 0.0
  %756 = vmatprep.subr.mxu0 0.0
  %757 = vmatpush2.msra.mxu0 0.0
  %758 = vmatprep.subr.mxu0 0.0
  %759 = vmatpush2.msra.mxu0 0.0
  %760 = vmatprep.subr.mxu0 0.0
  %761 = vmatpush2.msra.mxu0 0.0
  %762 = vmatprep.subr.mxu0 0.0
  %763 = vmatpush2.msra.mxu0 0.0
  %764 = vmatprep.subr.mxu0 0.0
  %765 = vmatpush2.msra.mxu0 0.0
  %766 = vmatprep.subr.mxu0 0.0
  %767 = vmatpush2.msra.mxu0 0.0
  %768 = vmatprep.subr.mxu0 0.0
  %769 = vmatpush2.msra.mxu0 0.0
  %770 = vmatprep.mubr.f32.mxu0 0.0
  %771 = vmatmul.mubr.f32.gmra.mxu0 %v704
  %v772 = vpop.f32.mrf.mxu0
  %v773 = vadd.f32 0.0, %v772
  %v774 = vpop.f32.mrf.mxu0
  %775 = vdwg.mxu0
  %v776 = vadd.f32 %v175, %v773
  %v777 = vxor.u32 %v776, 2147483648
  %v778 = vmul.f32 %v777, 1.442695
  %v779 = vpow.pop %v778
  %v780 = vadd.f32 %v779, 1.0
  %v781 = vrcp.pop %v780
  %v782 = vmul.f32 1.0, %v781
  %v783 = vtanh.pop %v776
  %v784 = vmul.f32 %v782, %v691
  %786 = vrot.lane.b32.xlu0 %v783, 64
  %v787 = vpop.permute.xlu0 %786
  %v789 = vmul.f32 %v782, %v787
  %791 = vrot.lane.b32.xlu0 %v789, 32
  %v792 = vpop.permute.xlu0 %791
  %v794 = vadd.f32 %v784, %v792
  %v795 = vtanh.pop %v794
  %797 = vrot.lane.b32.xlu0 %v795, 64
  %v798 = vpop.permute.xlu0 %797
  %v800 = vmul.f32 %v782, %v798
  %802 = vrot.lane.b32.xlu0 %v800, 32
  %v803 = vpop.permute.xlu0 %802
  %s805 = scalar_lea.vmem [#allocation2], 40
  %806 = vst.msk [vmem:[%s805] sm:$0xff] %vm188, %v803
  %v807 = vsel %vm188, %v803, 0
  %809 = vmatprep.subr.mxu0 0.0
  %810 = vmatpush1.msra.mxu0 0.0
  %811 = vmatprep.subr.mxu0 0.0
  %812 = vmatpush1.msra.mxu0 0.0
  %813 = vmatprep.subr.mxu0 0.0
  %814 = vmatpush1.msra.mxu0 0.0
  %815 = vmatprep.subr.mxu0 0.0
  %816 = vmatpush1.msra.mxu0 0.0
  %817 = vmatprep.subr.mxu0 0.0
  %818 = vmatpush1.msra.mxu0 0.0
  %819 = vmatprep.subr.mxu0 0.0
  %820 = vmatpush1.msra.mxu0 0.0
  %821 = vmatprep.subr.mxu0 0.0
  %822 = vmatpush1.msra.mxu0 0.0
  %823 = vmatprep.subr.mxu0 0.0
  %824 = vmatpush1.msra.mxu0 0.0
  %825 = vmatprep.subr.mxu0 0.0
  %826 = vmatpush1.msra.mxu0 0.0
  %827 = vmatprep.subr.mxu0 0.0
  %828 = vmatpush1.msra.mxu0 0.0
  %829 = vmatprep.subr.mxu0 0.0
  %830 = vmatpush1.msra.mxu0 0.0
  %831 = vmatprep.subr.mxu0 0.0
  %832 = vmatpush1.msra.mxu0 0.0
  %833 = vmatprep.subr.mxu0 0.0
  %834 = vmatpush1.msra.mxu0 %v49
  %835 = vmatprep.subr.mxu0 0.0
  %836 = vmatpush1.msra.mxu0 %v48
  %837 = vmatprep.subr.mxu0 0.0
  %838 = vmatpush1.msra.mxu0 %v47
  %839 = vmatprep.subr.mxu0 0.0
  %840 = vmatpush1.msra.mxu0 %v46
  %841 = vmatprep.subr.mxu0 0.0
  %842 = vmatpush2.msra.mxu0 0.0
  %843 = vmatprep.subr.mxu0 0.0
  %844 = vmatpush2.msra.mxu0 0.0
  %845 = vmatprep.subr.mxu0 0.0
  %846 = vmatpush2.msra.mxu0 0.0
  %847 = vmatprep.subr.mxu0 0.0
  %848 = vmatpush2.msra.mxu0 0.0
  %849 = vmatprep.subr.mxu0 0.0
  %850 = vmatpush2.msra.mxu0 0.0
  %851 = vmatprep.subr.mxu0 0.0
  %852 = vmatpush2.msra.mxu0 0.0
  %853 = vmatprep.subr.mxu0 0.0
  %854 = vmatpush2.msra.mxu0 0.0
  %855 = vmatprep.subr.mxu0 0.0
  %856 = vmatpush2.msra.mxu0 0.0
  %857 = vmatprep.subr.mxu0 0.0
  %858 = vmatpush2.msra.mxu0 0.0
  %859 = vmatprep.subr.mxu0 0.0
  %860 = vmatpush2.msra.mxu0 0.0
  %861 = vmatprep.subr.mxu0 0.0
  %862 = vmatpush2.msra.mxu0 0.0
  %863 = vmatprep.subr.mxu0 0.0
  %864 = vmatpush2.msra.mxu0 0.0
  %865 = vmatprep.subr.mxu0 0.0
  %866 = vmatpush2.msra.mxu0 0.0
  %867 = vmatprep.subr.mxu0 0.0
  %868 = vmatpush2.msra.mxu0 0.0
  %869 = vmatprep.subr.mxu0 0.0
  %870 = vmatpush2.msra.mxu0 0.0
  %871 = vmatprep.subr.mxu0 0.0
  %872 = vmatpush2.msra.mxu0 0.0
  %873 = vmatprep.mubr.f32.mxu0 0.0
  %874 = vmatmul.mubr.f32.gmra.mxu0 %v807
  %v875 = vpop.f32.mrf.mxu0
  %v876 = vadd.f32 0.0, %v875
  %v877 = vpop.f32.mrf.mxu0
  %878 = vdwg.mxu0
  %v879 = vadd.f32 %v180, %v876
  %v880 = vxor.u32 %v879, 2147483648
  %v881 = vmul.f32 %v880, 1.442695
  %v882 = vpow.pop %v881
  %v883 = vadd.f32 %v882, 1.0
  %v884 = vrcp.pop %v883
  %v885 = vmul.f32 1.0, %v884
  %v886 = vtanh.pop %v879
  %v887 = vmul.f32 %v885, %v794
  %889 = vrot.lane.b32.xlu0 %v886, 64
  %v890 = vpop.permute.xlu0 %889
  %v892 = vmul.f32 %v885, %v890
  %894 = vrot.lane.b32.xlu0 %v892, 32
  %v895 = vpop.permute.xlu0 %894
  %v897 = vadd.f32 %v887, %v895
  %v898 = vtanh.pop %v897
  %900 = vrot.lane.b32.xlu0 %v898, 64
  %v901 = vpop.permute.xlu0 %900
  %v903 = vmul.f32 %v885, %v901
  %905 = vrot.lane.b32.xlu0 %v903, 32
  %v906 = vpop.permute.xlu0 %905
  %s908 = scalar_lea.vmem [#allocation2], 48
  %909 = vst.msk [vmem:[%s908] sm:$0xff] %vm188, %v906
  %v910 = vsel %vm188, %v906, 0
  %912 = vmatprep.subr.mxu0 0.0
  %913 = vmatpush1.msra.mxu0 0.0
  %914 = vmatprep.subr.mxu0 0.0
  %915 = vmatpush1.msra.mxu0 0.0
  %916 = vmatprep.subr.mxu0 0.0
  %917 = vmatpush1.msra.mxu0 0.0
  %918 = vmatprep.subr.mxu0 0.0
  %919 = vmatpush1.msra.mxu0 0.0
  %920 = vmatprep.subr.mxu0 0.0
  %921 = vmatpush1.msra.mxu0 0.0
  %922 = vmatprep.subr.mxu0 0.0
  %923 = vmatpush1.msra.mxu0 0.0
  %924 = vmatprep.subr.mxu0 0.0
  %925 = vmatpush1.msra.mxu0 0.0
  %926 = vmatprep.subr.mxu0 0.0
  %927 = vmatpush1.msra.mxu0 0.0
  %928 = vmatprep.subr.mxu0 0.0
  %929 = vmatpush1.msra.mxu0 0.0
  %930 = vmatprep.subr.mxu0 0.0
  %931 = vmatpush1.msra.mxu0 0.0
  %932 = vmatprep.subr.mxu0 0.0
  %933 = vmatpush1.msra.mxu0 0.0
  %934 = vmatprep.subr.mxu0 0.0
  %935 = vmatpush1.msra.mxu0 0.0
  %936 = vmatprep.subr.mxu0 0.0
  %937 = vmatpush1.msra.mxu0 %v49
  %938 = vmatprep.subr.mxu0 0.0
  %939 = vmatpush1.msra.mxu0 %v48
  %940 = vmatprep.subr.mxu0 0.0
  %941 = vmatpush1.msra.mxu0 %v47
  %942 = vmatprep.subr.mxu0 0.0
  %943 = vmatpush1.msra.mxu0 %v46
  %944 = vmatprep.subr.mxu0 0.0
  %945 = vmatpush2.msra.mxu0 0.0
  %946 = vmatprep.subr.mxu0 0.0
  %947 = vmatpush2.msra.mxu0 0.0
  %948 = vmatprep.subr.mxu0 0.0
  %949 = vmatpush2.msra.mxu0 0.0
  %950 = vmatprep.subr.mxu0 0.0
  %951 = vmatpush2.msra.mxu0 0.0
  %952 = vmatprep.subr.mxu0 0.0
  %953 = vmatpush2.msra.mxu0 0.0
  %954 = vmatprep.subr.mxu0 0.0
  %955 = vmatpush2.msra.mxu0 0.0
  %956 = vmatprep.subr.mxu0 0.0
  %957 = vmatpush2.msra.mxu0 0.0
  %958 = vmatprep.subr.mxu0 0.0
  %959 = vmatpush2.msra.mxu0 0.0
  %960 = vmatprep.subr.mxu0 0.0
  %961 = vmatpush2.msra.mxu0 0.0
  %962 = vmatprep.subr.mxu0 0.0
  %963 = vmatpush2.msra.mxu0 0.0
  %964 = vmatprep.subr.mxu0 0.0
  %965 = vmatpush2.msra.mxu0 0.0
  %966 = vmatprep.subr.mxu0 0.0
  %967 = vmatpush2.msra.mxu0 0.0
  %968 = vmatprep.subr.mxu0 0.0
  %969 = vmatpush2.msra.mxu0 0.0
  %970 = vmatprep.subr.mxu0 0.0
  %971 = vmatpush2.msra.mxu0 0.0
  %972 = vmatprep.subr.mxu0 0.0
  %973 = vmatpush2.msra.mxu0 0.0
  %974 = vmatprep.subr.mxu0 0.0
  %975 = vmatpush2.msra.mxu0 0.0
  %976 = vmatprep.mubr.f32.mxu0 0.0
  %977 = vmatmul.mubr.f32.gmra.mxu0 %v910
  %v978 = vpop.f32.mrf.mxu0
  %v979 = vadd.f32 0.0, %v978
  %v980 = vpop.f32.mrf.mxu0
  %981 = vdwg.mxu0
  %v982 = vadd.f32 %v185, %v979
  %v983 = vxor.u32 %v982, 2147483648
  %v984 = vmul.f32 %v983, 1.442695
  %v985 = vpow.pop %v984
  %v986 = vadd.f32 %v985, 1.0
  %v987 = vrcp.pop %v986
  %v988 = vmul.f32 1.0, %v987
  %v989 = vtanh.pop %v982
  %v990 = vmul.f32 %v988, %v897
  %992 = vrot.lane.b32.xlu0 %v989, 64
  %v993 = vpop.permute.xlu0 %992
  %v995 = vmul.f32 %v988, %v993
  %997 = vrot.lane.b32.xlu0 %v995, 32
  %v998 = vpop.permute.xlu0 %997
  %v1000 = vadd.f32 %v990, %v998
  %v1001 = vtanh.pop %v1000
  %1003 = vrot.lane.b32.xlu0 %v1001, 64
  %v1004 = vpop.permute.xlu0 %1003
  %v1006 = vmul.f32 %v988, %v1004
  %1008 = vrot.lane.b32.xlu0 %v1006, 32
  %v1009 = vpop.permute.xlu0 %1008
  %s1011 = scalar_lea.vmem [#allocation2], 56
  %1012 = vst.msk [vmem:[%s1011] sm:$0xff] %vm188, %v1009
  %v1013 = vld [vmem:[#allocation2] sm:$0xff]
  %v1014 = vld [vmem:[#allocation2 + $0x8] sm:$0xff]
  %v1015 = vld [vmem:[#allocation2 + $0x10] sm:$0xff]
  %v1016 = vld [vmem:[#allocation2 + $0x18] sm:$0xff]
  %v1017 = vld [vmem:[#allocation2 + $0x20] sm:$0xff]
  %v1018 = vld [vmem:[#allocation2 + $0x28] sm:$0xff]
  %v1019 = vld [vmem:[#allocation2 + $0x30] sm:$0xff]
  %v1020 = vld [vmem:[#allocation2 + $0x38] sm:$0xff]
  %v1021 = vld [vmem:[%s5] sm:$0xff]
  %v1022 = vld [vmem:[%s5 + $0x8] sm:$0xff]
  %v1023 = vld [vmem:[%s5 + $0x10] sm:$0xff]
  %v1024 = vld [vmem:[%s5 + $0x18] sm:$0xff]
  %v1025 = vld [vmem:[%s4] sm:$0xff]
  %v1026 = vld [vmem:[%s4 + $0x8] sm:$0xff]
  %v1027 = vld [vmem:[%s4 + $0x10] sm:$0xff]
  %v1028 = vld [vmem:[%s4 + $0x18] sm:$0xff]
  %v1029 = vld [vmem:[%s6] sm:$0x1]
  %v1031 = vlaneseq
  %v1032 = vshrl.u32 %v1031, 7
  %v1033 = vsub.s32 0, %v1032
  %v1034 = vrot.slane %v1029, %v1033
  %v1037 = vsel %vm188, %v1013, 0
  %v1040 = vsel %vm188, %v1014, 0
  %v1043 = vsel %vm188, %v1015, 0
  %v1046 = vsel %vm188, %v1016, 0
  %v1049 = vsel %vm188, %v1017, 0
  %v1052 = vsel %vm188, %v1018, 0
  %v1055 = vsel %vm188, %v1019, 0
  %v1058 = vsel %vm188, %v1020, 0
  %1060 = vmatprep.subr.mxu0 0.0
  %1061 = vmatpush1.msra.mxu0 0.0
  %1062 = vmatprep.subr.mxu0 0.0
  %1063 = vmatpush1.msra.mxu0 0.0
  %1064 = vmatprep.subr.mxu0 0.0
  %1065 = vmatpush1.msra.mxu0 0.0
  %1066 = vmatprep.subr.mxu0 0.0
  %1067 = vmatpush1.msra.mxu0 0.0
  %1068 = vmatprep.subr.mxu0 0.0
  %1069 = vmatpush1.msra.mxu0 0.0
  %1070 = vmatprep.subr.mxu0 0.0
  %1071 = vmatpush1.msra.mxu0 0.0
  %1072 = vmatprep.subr.mxu0 0.0
  %1073 = vmatpush1.msra.mxu0 0.0
  %1074 = vmatprep.subr.mxu0 0.0
  %1075 = vmatpush1.msra.mxu0 0.0
  %1076 = vmatprep.subr.mxu0 0.0
  %1077 = vmatpush1.msra.mxu0 0.0
  %1078 = vmatprep.subr.mxu0 0.0
  %1079 = vmatpush1.msra.mxu0 0.0
  %1080 = vmatprep.subr.mxu0 0.0
  %1081 = vmatpush1.msra.mxu0 0.0
  %1082 = vmatprep.subr.mxu0 0.0
  %1083 = vmatpush1.msra.mxu0 0.0
  %1084 = vmatprep.subr.mxu0 0.0
  %1085 = vmatpush1.msra.mxu0 %v1028
  %1086 = vmatprep.subr.mxu0 0.0
  %1087 = vmatpush1.msra.mxu0 %v1027
  %1088 = vmatprep.subr.mxu0 0.0
  %1089 = vmatpush1.msra.mxu0 %v1026
  %1090 = vmatprep.subr.mxu0 0.0
  %1091 = vmatpush1.msra.mxu0 %v1025
  %1092 = vmatprep.subr.mxu0 0.0
  %1093 = vmatpush2.msra.mxu0 0.0
  %1094 = vmatprep.subr.mxu0 0.0
  %1095 = vmatpush2.msra.mxu0 0.0
  %1096 = vmatprep.subr.mxu0 0.0
  %1097 = vmatpush2.msra.mxu0 0.0
  %1098 = vmatprep.subr.mxu0 0.0
  %1099 = vmatpush2.msra.mxu0 0.0
  %1100 = vmatprep.subr.mxu0 0.0
  %1101 = vmatpush2.msra.mxu0 0.0
  %1102 = vmatprep.subr.mxu0 0.0
  %1103 = vmatpush2.msra.mxu0 0.0
  %1104 = vmatprep.subr.mxu0 0.0
  %1105 = vmatpush2.msra.mxu0 0.0
  %1106 = vmatprep.subr.mxu0 0.0
  %1107 = vmatpush2.msra.mxu0 0.0
  %1108 = vmatprep.subr.mxu0 0.0
  %1109 = vmatpush2.msra.mxu0 0.0
  %1110 = vmatprep.subr.mxu0 0.0
  %1111 = vmatpush2.msra.mxu0 0.0
  %1112 = vmatprep.subr.mxu0 0.0
  %1113 = vmatpush2.msra.mxu0 0.0
  %1114 = vmatprep.subr.mxu0 0.0
  %1115 = vmatpush2.msra.mxu0 0.0
  %1116 = vmatprep.subr.mxu0 0.0
  %1117 = vmatpush2.msra.mxu0 0.0
  %1118 = vmatprep.subr.mxu0 0.0
  %1119 = vmatpush2.msra.mxu0 0.0
  %1120 = vmatprep.subr.mxu0 0.0
  %1121 = vmatpush2.msra.mxu0 0.0
  %1122 = vmatprep.subr.mxu0 0.0
  %1123 = vmatpush2.msra.mxu0 0.0
  %1124 = vmatprep.mubr.f32.mxu0 0.0
  %1125 = vmatmul.mubr.f32.gmra.mxu0 %v1037
  %v1126 = vpop.f32.mrf.mxu0
  %v1127 = vadd.f32 %v1034, %v1126
  %v1128 = vpop.f32.mrf.mxu0
  %1129 = vmatprep.mubr.f32.mxu0 0.0
  %1130 = vmatmul.mubr.f32.gmra.mxu0 %v1040
  %v1131 = vpop.f32.mrf.mxu0
  %v1132 = vadd.f32 %v1034, %v1131
  %v1133 = vpop.f32.mrf.mxu0
  %1134 = vmatprep.mubr.f32.mxu0 0.0
  %1135 = vmatmul.mubr.f32.gmra.mxu0 %v1043
  %v1136 = vpop.f32.mrf.mxu0
  %v1137 = vadd.f32 %v1034, %v1136
  %v1138 = vpop.f32.mrf.mxu0
  %1139 = vmatprep.mubr.f32.mxu0 0.0
  %1140 = vmatmul.mubr.f32.gmra.mxu0 %v1046
  %v1141 = vpop.f32.mrf.mxu0
  %v1142 = vadd.f32 %v1034, %v1141
  %v1143 = vpop.f32.mrf.mxu0
  %1144 = vmatprep.mubr.f32.mxu0 0.0
  %1145 = vmatmul.mubr.f32.gmra.mxu0 %v1049
  %v1146 = vpop.f32.mrf.mxu0
  %v1147 = vadd.f32 %v1034, %v1146
  %v1148 = vpop.f32.mrf.mxu0
  %1149 = vmatprep.mubr.f32.mxu0 0.0
  %1150 = vmatmul.mubr.f32.gmra.mxu0 %v1052
  %v1151 = vpop.f32.mrf.mxu0
  %v1152 = vadd.f32 %v1034, %v1151
  %v1153 = vpop.f32.mrf.mxu0
  %1154 = vmatprep.mubr.f32.mxu0 0.0
  %1155 = vmatmul.mubr.f32.gmra.mxu0 %v1055
  %v1156 = vpop.f32.mrf.mxu0
  %v1157 = vadd.f32 %v1034, %v1156
  %v1158 = vpop.f32.mrf.mxu0
  %1159 = vmatprep.mubr.f32.mxu0 0.0
  %1160 = vmatmul.mubr.f32.gmra.mxu0 %v1058
  %v1161 = vpop.f32.mrf.mxu0
  %v1162 = vadd.f32 %v1034, %v1161
  %v1163 = vpop.f32.mrf.mxu0
  %1164 = vdwg.mxu0
  %1165 = vmatprep.subr.mxu0 0.0
  %1166 = vmatpush1.msra.mxu0 0.0
  %1167 = vmatprep.subr.mxu0 0.0
  %1168 = vmatpush1.msra.mxu0 0.0
  %1169 = vmatprep.subr.mxu0 0.0
  %1170 = vmatpush1.msra.mxu0 0.0
  %1171 = vmatprep.subr.mxu0 0.0
  %1172 = vmatpush1.msra.mxu0 0.0
  %1173 = vmatprep.subr.mxu0 0.0
  %1174 = vmatpush1.msra.mxu0 0.0
  %1175 = vmatprep.subr.mxu0 0.0
  %1176 = vmatpush1.msra.mxu0 0.0
  %1177 = vmatprep.subr.mxu0 0.0
  %1178 = vmatpush1.msra.mxu0 0.0
  %1179 = vmatprep.subr.mxu0 0.0
  %1180 = vmatpush1.msra.mxu0 0.0
  %1181 = vmatprep.subr.mxu0 0.0
  %1182 = vmatpush1.msra.mxu0 0.0
  %1183 = vmatprep.subr.mxu0 0.0
  %1184 = vmatpush1.msra.mxu0 0.0
  %1185 = vmatprep.subr.mxu0 0.0
  %1186 = vmatpush1.msra.mxu0 0.0
  %1187 = vmatprep.subr.mxu0 0.0
  %1188 = vmatpush1.msra.mxu0 0.0
  %1189 = vmatprep.subr.mxu0 0.0
  %1190 = vmatpush1.msra.mxu0 %v1024
  %1191 = vmatprep.subr.mxu0 0.0
  %1192 = vmatpush1.msra.mxu0 %v1023
  %1193 = vmatprep.subr.mxu0 0.0
  %1194 = vmatpush1.msra.mxu0 %v1022
  %1195 = vmatprep.subr.mxu0 0.0
  %1196 = vmatpush1.msra.mxu0 %v1021
  %1197 = vmatprep.subr.mxu0 0.0
  %1198 = vmatpush2.msra.mxu0 0.0
  %1199 = vmatprep.subr.mxu0 0.0
  %1200 = vmatpush2.msra.mxu0 0.0
  %1201 = vmatprep.subr.mxu0 0.0
  %1202 = vmatpush2.msra.mxu0 0.0
  %1203 = vmatprep.subr.mxu0 0.0
  %1204 = vmatpush2.msra.mxu0 0.0
  %1205 = vmatprep.subr.mxu0 0.0
  %1206 = vmatpush2.msra.mxu0 0.0
  %1207 = vmatprep.subr.mxu0 0.0
  %1208 = vmatpush2.msra.mxu0 0.0
  %1209 = vmatprep.subr.mxu0 0.0
  %1210 = vmatpush2.msra.mxu0 0.0
  %1211 = vmatprep.subr.mxu0 0.0
  %1212 = vmatpush2.msra.mxu0 0.0
  %1213 = vmatprep.subr.mxu0 0.0
  %1214 = vmatpush2.msra.mxu0 0.0
  %1215 = vmatprep.subr.mxu0 0.0
  %1216 = vmatpush2.msra.mxu0 0.0
  %1217 = vmatprep.subr.mxu0 0.0
  %1218 = vmatpush2.msra.mxu0 0.0
  %1219 = vmatprep.subr.mxu0 0.0
  %1220 = vmatpush2.msra.mxu0 0.0
  %1221 = vmatprep.subr.mxu0 0.0
  %1222 = vmatpush2.msra.mxu0 0.0
  %1223 = vmatprep.subr.mxu0 0.0
  %1224 = vmatpush2.msra.mxu0 0.0
  %1225 = vmatprep.subr.mxu0 0.0
  %1226 = vmatpush2.msra.mxu0 0.0
  %1227 = vmatprep.subr.mxu0 0.0
  %1228 = vmatpush2.msra.mxu0 0.0
  %1229 = vmatprep.mubr.f32.mxu0 0.0
  %1230 = vmatmul.mubr.f32.gmra.mxu0 %v190
  %v1231 = vpop.f32.mrf.mxu0
  %v1232 = vadd.f32 0.0, %v1231
  %v1233 = vpop.f32.mrf.mxu0
  %1234 = vdwg.mxu0
  %v1235 = vadd.f32 %v1127, %v1232
  %v1236 = vxor.u32 %v1235, 2147483648
  %v1237 = vmul.f32 %v1236, 1.442695
  %v1238 = vpow.pop %v1237
  %v1239 = vadd.f32 %v1238, 1.0
  %v1240 = vrcp.pop %v1239
  %v1241 = vmul.f32 1.0, %v1240
  %v1242 = vtanh.pop %v1235
  %v1243 = vmul.f32 %v1241, 0.0
  %1245 = vrot.lane.b32.xlu0 %v1242, 64
  %v1246 = vpop.permute.xlu0 %1245
  %v1248 = vmul.f32 %v1241, %v1246
  %1250 = vrot.lane.b32.xlu0 %v1248, 32
  %v1251 = vpop.permute.xlu0 %1250
  %v1253 = vadd.f32 %v1243, %v1251
  %v1254 = vtanh.pop %v1253
  %1256 = vrot.lane.b32.xlu0 %v1254, 64
  %v1257 = vpop.permute.xlu0 %1256
  %v1259 = vmul.f32 %v1241, %v1257
  %1261 = vrot.lane.b32.xlu0 %v1259, 32
  %v1262 = vpop.permute.xlu0 %1261
  %v1263 = vsel %vm188, %v1262, 0
  %1265 = vmatprep.subr.mxu0 0.0
  %1266 = vmatpush1.msra.mxu0 0.0
  %1267 = vmatprep.subr.mxu0 0.0
  %1268 = vmatpush1.msra.mxu0 0.0
  %1269 = vmatprep.subr.mxu0 0.0
  %1270 = vmatpush1.msra.mxu0 0.0
  %1271 = vmatprep.subr.mxu0 0.0
  %1272 = vmatpush1.msra.mxu0 0.0
  %1273 = vmatprep.subr.mxu0 0.0
  %1274 = vmatpush1.msra.mxu0 0.0
  %1275 = vmatprep.subr.mxu0 0.0
  %1276 = vmatpush1.msra.mxu0 0.0
  %1277 = vmatprep.subr.mxu0 0.0
  %1278 = vmatpush1.msra.mxu0 0.0
  %1279 = vmatprep.subr.mxu0 0.0
  %1280 = vmatpush1.msra.mxu0 0.0
  %1281 = vmatprep.subr.mxu0 0.0
  %1282 = vmatpush1.msra.mxu0 0.0
  %1283 = vmatprep.subr.mxu0 0.0
  %1284 = vmatpush1.msra.mxu0 0.0
  %1285 = vmatprep.subr.mxu0 0.0
  %1286 = vmatpush1.msra.mxu0 0.0
  %1287 = vmatprep.subr.mxu0 0.0
  %1288 = vmatpush1.msra.mxu0 0.0
  %1289 = vmatprep.subr.mxu0 0.0
  %1290 = vmatpush1.msra.mxu0 %v1024
  %1291 = vmatprep.subr.mxu0 0.0
  %1292 = vmatpush1.msra.mxu0 %v1023
  %1293 = vmatprep.subr.mxu0 0.0
  %1294 = vmatpush1.msra.mxu0 %v1022
  %1295 = vmatprep.subr.mxu0 0.0
  %1296 = vmatpush1.msra.mxu0 %v1021
  %1297 = vmatprep.subr.mxu0 0.0
  %1298 = vmatpush2.msra.mxu0 0.0
  %1299 = vmatprep.subr.mxu0 0.0
  %1300 = vmatpush2.msra.mxu0 0.0
  %1301 = vmatprep.subr.mxu0 0.0
  %1302 = vmatpush2.msra.mxu0 0.0
  %1303 = vmatprep.subr.mxu0 0.0
  %1304 = vmatpush2.msra.mxu0 0.0
  %1305 = vmatprep.subr.mxu0 0.0
  %1306 = vmatpush2.msra.mxu0 0.0
  %1307 = vmatprep.subr.mxu0 0.0
  %1308 = vmatpush2.msra.mxu0 0.0
  %1309 = vmatprep.subr.mxu0 0.0
  %1310 = vmatpush2.msra.mxu0 0.0
  %1311 = vmatprep.subr.mxu0 0.0
  %1312 = vmatpush2.msra.mxu0 0.0
  %1313 = vmatprep.subr.mxu0 0.0
  %1314 = vmatpush2.msra.mxu0 0.0
  %1315 = vmatprep.subr.mxu0 0.0
  %1316 = vmatpush2.msra.mxu0 0.0
  %1317 = vmatprep.subr.mxu0 0.0
  %1318 = vmatpush2.msra.mxu0 0.0
  %1319 = vmatprep.subr.mxu0 0.0
  %1320 = vmatpush2.msra.mxu0 0.0
  %1321 = vmatprep.subr.mxu0 0.0
  %1322 = vmatpush2.msra.mxu0 0.0
  %1323 = vmatprep.subr.mxu0 0.0
  %1324 = vmatpush2.msra.mxu0 0.0
  %1325 = vmatprep.subr.mxu0 0.0
  %1326 = vmatpush2.msra.mxu0 0.0
  %1327 = vmatprep.subr.mxu0 0.0
  %1328 = vmatpush2.msra.mxu0 0.0
  %1329 = vmatprep.mubr.f32.mxu0 0.0
  %1330 = vmatmul.mubr.f32.gmra.mxu0 %v1263
  %v1331 = vpop.f32.mrf.mxu0
  %v1332 = vadd.f32 0.0, %v1331
  %v1333 = vpop.f32.mrf.mxu0
  %1334 = vdwg.mxu0
  %v1335 = vadd.f32 %v1132, %v1332
  %v1336 = vxor.u32 %v1335, 2147483648
  %v1337 = vmul.f32 %v1336, 1.442695
  %v1338 = vpow.pop %v1337
  %v1339 = vadd.f32 %v1338, 1.0
  %v1340 = vrcp.pop %v1339
  %v1341 = vmul.f32 1.0, %v1340
  %v1342 = vtanh.pop %v1335
  %v1343 = vmul.f32 %v1341, %v1253
  %1345 = vrot.lane.b32.xlu0 %v1342, 64
  %v1346 = vpop.permute.xlu0 %1345
  %v1348 = vmul.f32 %v1341, %v1346
  %1350 = vrot.lane.b32.xlu0 %v1348, 32
  %v1351 = vpop.permute.xlu0 %1350
  %v1353 = vadd.f32 %v1343, %v1351
  %v1354 = vtanh.pop %v1353
  %1356 = vrot.lane.b32.xlu0 %v1354, 64
  %v1357 = vpop.permute.xlu0 %1356
  %v1359 = vmul.f32 %v1341, %v1357
  %1361 = vrot.lane.b32.xlu0 %v1359, 32
  %v1362 = vpop.permute.xlu0 %1361
  %v1363 = vsel %vm188, %v1362, 0
  %1365 = vmatprep.subr.mxu0 0.0
  %1366 = vmatpush1.msra.mxu0 0.0
  %1367 = vmatprep.subr.mxu0 0.0
  %1368 = vmatpush1.msra.mxu0 0.0
  %1369 = vmatprep.subr.mxu0 0.0
  %1370 = vmatpush1.msra.mxu0 0.0
  %1371 = vmatprep.subr.mxu0 0.0
  %1372 = vmatpush1.msra.mxu0 0.0
  %1373 = vmatprep.subr.mxu0 0.0
  %1374 = vmatpush1.msra.mxu0 0.0
  %1375 = vmatprep.subr.mxu0 0.0
  %1376 = vmatpush1.msra.mxu0 0.0
  %1377 = vmatprep.subr.mxu0 0.0
  %1378 = vmatpush1.msra.mxu0 0.0
  %1379 = vmatprep.subr.mxu0 0.0
  %1380 = vmatpush1.msra.mxu0 0.0
  %1381 = vmatprep.subr.mxu0 0.0
  %1382 = vmatpush1.msra.mxu0 0.0
  %1383 = vmatprep.subr.mxu0 0.0
  %1384 = vmatpush1.msra.mxu0 0.0
  %1385 = vmatprep.subr.mxu0 0.0
  %1386 = vmatpush1.msra.mxu0 0.0
  %1387 = vmatprep.subr.mxu0 0.0
  %1388 = vmatpush1.msra.mxu0 0.0
  %1389 = vmatprep.subr.mxu0 0.0
  %1390 = vmatpush1.msra.mxu0 %v1024
  %1391 = vmatprep.subr.mxu0 0.0
  %1392 = vmatpush1.msra.mxu0 %v1023
  %1393 = vmatprep.subr.mxu0 0.0
  %1394 = vmatpush1.msra.mxu0 %v1022
  %1395 = vmatprep.subr.mxu0 0.0
  %1396 = vmatpush1.msra.mxu0 %v1021
  %1397 = vmatprep.subr.mxu0 0.0
  %1398 = vmatpush2.msra.mxu0 0.0
  %1399 = vmatprep.subr.mxu0 0.0
  %1400 = vmatpush2.msra.mxu0 0.0
  %1401 = vmatprep.subr.mxu0 0.0
  %1402 = vmatpush2.msra.mxu0 0.0
  %1403 = vmatprep.subr.mxu0 0.0
  %1404 = vmatpush2.msra.mxu0 0.0
  %1405 = vmatprep.subr.mxu0 0.0
  %1406 = vmatpush2.msra.mxu0 0.0
  %1407 = vmatprep.subr.mxu0 0.0
  %1408 = vmatpush2.msra.mxu0 0.0
  %1409 = vmatprep.subr.mxu0 0.0
  %1410 = vmatpush2.msra.mxu0 0.0
  %1411 = vmatprep.subr.mxu0 0.0
  %1412 = vmatpush2.msra.mxu0 0.0
  %1413 = vmatprep.subr.mxu0 0.0
  %1414 = vmatpush2.msra.mxu0 0.0
  %1415 = vmatprep.subr.mxu0 0.0
  %1416 = vmatpush2.msra.mxu0 0.0
  %1417 = vmatprep.subr.mxu0 0.0
  %1418 = vmatpush2.msra.mxu0 0.0
  %1419 = vmatprep.subr.mxu0 0.0
  %1420 = vmatpush2.msra.mxu0 0.0
  %1421 = vmatprep.subr.mxu0 0.0
  %1422 = vmatpush2.msra.mxu0 0.0
  %1423 = vmatprep.subr.mxu0 0.0
  %1424 = vmatpush2.msra.mxu0 0.0
  %1425 = vmatprep.subr.mxu0 0.0
  %1426 = vmatpush2.msra.mxu0 0.0
  %1427 = vmatprep.subr.mxu0 0.0
  %1428 = vmatpush2.msra.mxu0 0.0
  %1429 = vmatprep.mubr.f32.mxu0 0.0
  %1430 = vmatmul.mubr.f32.gmra.mxu0 %v1363
  %v1431 = vpop.f32.mrf.mxu0
  %v1432 = vadd.f32 0.0, %v1431
  %v1433 = vpop.f32.mrf.mxu0
  %1434 = vdwg.mxu0
  %v1435 = vadd.f32 %v1137, %v1432
  %v1436 = vxor.u32 %v1435, 2147483648
  %v1437 = vmul.f32 %v1436, 1.442695
  %v1438 = vpow.pop %v1437
  %v1439 = vadd.f32 %v1438, 1.0
  %v1440 = vrcp.pop %v1439
  %v1441 = vmul.f32 1.0, %v1440
  %v1442 = vtanh.pop %v1435
  %v1443 = vmul.f32 %v1441, %v1353
  %1445 = vrot.lane.b32.xlu0 %v1442, 64
  %v1446 = vpop.permute.xlu0 %1445
  %v1448 = vmul.f32 %v1441, %v1446
  %1450 = vrot.lane.b32.xlu0 %v1448, 32
  %v1451 = vpop.permute.xlu0 %1450
  %v1453 = vadd.f32 %v1443, %v1451
  %v1454 = vtanh.pop %v1453
  %1456 = vrot.lane.b32.xlu0 %v1454, 64
  %v1457 = vpop.permute.xlu0 %1456
  %v1459 = vmul.f32 %v1441, %v1457
  %1461 = vrot.lane.b32.xlu0 %v1459, 32
  %v1462 = vpop.permute.xlu0 %1461
  %v1463 = vsel %vm188, %v1462, 0
  %1465 = vmatprep.subr.mxu0 0.0
  %1466 = vmatpush1.msra.mxu0 0.0
  %1467 = vmatprep.subr.mxu0 0.0
  %1468 = vmatpush1.msra.mxu0 0.0
  %1469 = vmatprep.subr.mxu0 0.0
  %1470 = vmatpush1.msra.mxu0 0.0
  %1471 = vmatprep.subr.mxu0 0.0
  %1472 = vmatpush1.msra.mxu0 0.0
  %1473 = vmatprep.subr.mxu0 0.0
  %1474 = vmatpush1.msra.mxu0 0.0
  %1475 = vmatprep.subr.mxu0 0.0
  %1476 = vmatpush1.msra.mxu0 0.0
  %1477 = vmatprep.subr.mxu0 0.0
  %1478 = vmatpush1.msra.mxu0 0.0
  %1479 = vmatprep.subr.mxu0 0.0
  %1480 = vmatpush1.msra.mxu0 0.0
  %1481 = vmatprep.subr.mxu0 0.0
  %1482 = vmatpush1.msra.mxu0 0.0
  %1483 = vmatprep.subr.mxu0 0.0
  %1484 = vmatpush1.msra.mxu0 0.0
  %1485 = vmatprep.subr.mxu0 0.0
  %1486 = vmatpush1.msra.mxu0 0.0
  %1487 = vmatprep.subr.mxu0 0.0
  %1488 = vmatpush1.msra.mxu0 0.0
  %1489 = vmatprep.subr.mxu0 0.0
  %1490 = vmatpush1.msra.mxu0 %v1024
  %1491 = vmatprep.subr.mxu0 0.0
  %1492 = vmatpush1.msra.mxu0 %v1023
  %1493 = vmatprep.subr.mxu0 0.0
  %1494 = vmatpush1.msra.mxu0 %v1022
  %1495 = vmatprep.subr.mxu0 0.0
  %1496 = vmatpush1.msra.mxu0 %v1021
  %1497 = vmatprep.subr.mxu0 0.0
  %1498 = vmatpush2.msra.mxu0 0.0
  %1499 = vmatprep.subr.mxu0 0.0
  %1500 = vmatpush2.msra.mxu0 0.0
  %1501 = vmatprep.subr.mxu0 0.0
  %1502 = vmatpush2.msra.mxu0 0.0
  %1503 = vmatprep.subr.mxu0 0.0
  %1504 = vmatpush2.msra.mxu0 0.0
  %1505 = vmatprep.subr.mxu0 0.0
  %1506 = vmatpush2.msra.mxu0 0.0
  %1507 = vmatprep.subr.mxu0 0.0
  %1508 = vmatpush2.msra.mxu0 0.0
  %1509 = vmatprep.subr.mxu0 0.0
  %1510 = vmatpush2.msra.mxu0 0.0
  %1511 = vmatprep.subr.mxu0 0.0
  %1512 = vmatpush2.msra.mxu0 0.0
  %1513 = vmatprep.subr.mxu0 0.0
  %1514 = vmatpush2.msra.mxu0 0.0
  %1515 = vmatprep.subr.mxu0 0.0
  %1516 = vmatpush2.msra.mxu0 0.0
  %1517 = vmatprep.subr.mxu0 0.0
  %1518 = vmatpush2.msra.mxu0 0.0
  %1519 = vmatprep.subr.mxu0 0.0
  %1520 = vmatpush2.msra.mxu0 0.0
  %1521 = vmatprep.subr.mxu0 0.0
  %1522 = vmatpush2.msra.mxu0 0.0
  %1523 = vmatprep.subr.mxu0 0.0
  %1524 = vmatpush2.msra.mxu0 0.0
  %1525 = vmatprep.subr.mxu0 0.0
  %1526 = vmatpush2.msra.mxu0 0.0
  %1527 = vmatprep.subr.mxu0 0.0
  %1528 = vmatpush2.msra.mxu0 0.0
  %1529 = vmatprep.mubr.f32.mxu0 0.0
  %1530 = vmatmul.mubr.f32.gmra.mxu0 %v1463
  %v1531 = vpop.f32.mrf.mxu0
  %v1532 = vadd.f32 0.0, %v1531
  %v1533 = vpop.f32.mrf.mxu0
  %1534 = vdwg.mxu0
  %v1535 = vadd.f32 %v1142, %v1532
  %v1536 = vxor.u32 %v1535, 2147483648
  %v1537 = vmul.f32 %v1536, 1.442695
  %v1538 = vpow.pop %v1537
  %v1539 = vadd.f32 %v1538, 1.0
  %v1540 = vrcp.pop %v1539
  %v1541 = vmul.f32 1.0, %v1540
  %v1542 = vtanh.pop %v1535
  %v1543 = vmul.f32 %v1541, %v1453
  %1545 = vrot.lane.b32.xlu0 %v1542, 64
  %v1546 = vpop.permute.xlu0 %1545
  %v1548 = vmul.f32 %v1541, %v1546
  %1550 = vrot.lane.b32.xlu0 %v1548, 32
  %v1551 = vpop.permute.xlu0 %1550
  %v1553 = vadd.f32 %v1543, %v1551
  %v1554 = vtanh.pop %v1553
  %1556 = vrot.lane.b32.xlu0 %v1554, 64
  %v1557 = vpop.permute.xlu0 %1556
  %v1559 = vmul.f32 %v1541, %v1557
  %1561 = vrot.lane.b32.xlu0 %v1559, 32
  %v1562 = vpop.permute.xlu0 %1561
  %v1563 = vsel %vm188, %v1562, 0
  %1565 = vmatprep.subr.mxu0 0.0
  %1566 = vmatpush1.msra.mxu0 0.0
  %1567 = vmatprep.subr.mxu0 0.0
  %1568 = vmatpush1.msra.mxu0 0.0
  %1569 = vmatprep.subr.mxu0 0.0
  %1570 = vmatpush1.msra.mxu0 0.0
  %1571 = vmatprep.subr.mxu0 0.0
  %1572 = vmatpush1.msra.mxu0 0.0
  %1573 = vmatprep.subr.mxu0 0.0
  %1574 = vmatpush1.msra.mxu0 0.0
  %1575 = vmatprep.subr.mxu0 0.0
  %1576 = vmatpush1.msra.mxu0 0.0
  %1577 = vmatprep.subr.mxu0 0.0
  %1578 = vmatpush1.msra.mxu0 0.0
  %1579 = vmatprep.subr.mxu0 0.0
  %1580 = vmatpush1.msra.mxu0 0.0
  %1581 = vmatprep.subr.mxu0 0.0
  %1582 = vmatpush1.msra.mxu0 0.0
  %1583 = vmatprep.subr.mxu0 0.0
  %1584 = vmatpush1.msra.mxu0 0.0
  %1585 = vmatprep.subr.mxu0 0.0
  %1586 = vmatpush1.msra.mxu0 0.0
  %1587 = vmatprep.subr.mxu0 0.0
  %1588 = vmatpush1.msra.mxu0 0.0
  %1589 = vmatprep.subr.mxu0 0.0
  %1590 = vmatpush1.msra.mxu0 %v1024
  %1591 = vmatprep.subr.mxu0 0.0
  %1592 = vmatpush1.msra.mxu0 %v1023
  %1593 = vmatprep.subr.mxu0 0.0
  %1594 = vmatpush1.msra.mxu0 %v1022
  %1595 = vmatprep.subr.mxu0 0.0
  %1596 = vmatpush1.msra.mxu0 %v1021
  %1597 = vmatprep.subr.mxu0 0.0
  %1598 = vmatpush2.msra.mxu0 0.0
  %1599 = vmatprep.subr.mxu0 0.0
  %1600 = vmatpush2.msra.mxu0 0.0
  %1601 = vmatprep.subr.mxu0 0.0
  %1602 = vmatpush2.msra.mxu0 0.0
  %1603 = vmatprep.subr.mxu0 0.0
  %1604 = vmatpush2.msra.mxu0 0.0
  %1605 = vmatprep.subr.mxu0 0.0
  %1606 = vmatpush2.msra.mxu0 0.0
  %1607 = vmatprep.subr.mxu0 0.0
  %1608 = vmatpush2.msra.mxu0 0.0
  %1609 = vmatprep.subr.mxu0 0.0
  %1610 = vmatpush2.msra.mxu0 0.0
  %1611 = vmatprep.subr.mxu0 0.0
  %1612 = vmatpush2.msra.mxu0 0.0
  %1613 = vmatprep.subr.mxu0 0.0
  %1614 = vmatpush2.msra.mxu0 0.0
  %1615 = vmatprep.subr.mxu0 0.0
  %1616 = vmatpush2.msra.mxu0 0.0
  %1617 = vmatprep.subr.mxu0 0.0
  %1618 = vmatpush2.msra.mxu0 0.0
  %1619 = vmatprep.subr.mxu0 0.0
  %1620 = vmatpush2.msra.mxu0 0.0
  %1621 = vmatprep.subr.mxu0 0.0
  %1622 = vmatpush2.msra.mxu0 0.0
  %1623 = vmatprep.subr.mxu0 0.0
  %1624 = vmatpush2.msra.mxu0 0.0
  %1625 = vmatprep.subr.mxu0 0.0
  %1626 = vmatpush2.msra.mxu0 0.0
  %1627 = vmatprep.subr.mxu0 0.0
  %1628 = vmatpush2.msra.mxu0 0.0
  %1629 = vmatprep.mubr.f32.mxu0 0.0
  %1630 = vmatmul.mubr.f32.gmra.mxu0 %v1563
  %v1631 = vpop.f32.mrf.mxu0
  %v1632 = vadd.f32 0.0, %v1631
  %v1633 = vpop.f32.mrf.mxu0
  %1634 = vdwg.mxu0
  %v1635 = vadd.f32 %v1147, %v1632
  %v1636 = vxor.u32 %v1635, 2147483648
  %v1637 = vmul.f32 %v1636, 1.442695
  %v1638 = vpow.pop %v1637
  %v1639 = vadd.f32 %v1638, 1.0
  %v1640 = vrcp.pop %v1639
  %v1641 = vmul.f32 1.0, %v1640
  %v1642 = vtanh.pop %v1635
  %v1643 = vmul.f32 %v1641, %v1553
  %1645 = vrot.lane.b32.xlu0 %v1642, 64
  %v1646 = vpop.permute.xlu0 %1645
  %v1648 = vmul.f32 %v1641, %v1646
  %1650 = vrot.lane.b32.xlu0 %v1648, 32
  %v1651 = vpop.permute.xlu0 %1650
  %v1653 = vadd.f32 %v1643, %v1651
  %v1654 = vtanh.pop %v1653
  %1656 = vrot.lane.b32.xlu0 %v1654, 64
  %v1657 = vpop.permute.xlu0 %1656
  %v1659 = vmul.f32 %v1641, %v1657
  %1661 = vrot.lane.b32.xlu0 %v1659, 32
  %v1662 = vpop.permute.xlu0 %1661
  %v1663 = vsel %vm188, %v1662, 0
  %1665 = vmatprep.subr.mxu0 0.0
  %1666 = vmatpush1.msra.mxu0 0.0
  %1667 = vmatprep.subr.mxu0 0.0
  %1668 = vmatpush1.msra.mxu0 0.0
  %1669 = vmatprep.subr.mxu0 0.0
  %1670 = vmatpush1.msra.mxu0 0.0
  %1671 = vmatprep.subr.mxu0 0.0
  %1672 = vmatpush1.msra.mxu0 0.0
  %1673 = vmatprep.subr.mxu0 0.0
  %1674 = vmatpush1.msra.mxu0 0.0
  %1675 = vmatprep.subr.mxu0 0.0
  %1676 = vmatpush1.msra.mxu0 0.0
  %1677 = vmatprep.subr.mxu0 0.0
  %1678 = vmatpush1.msra.mxu0 0.0
  %1679 = vmatprep.subr.mxu0 0.0
  %1680 = vmatpush1.msra.mxu0 0.0
  %1681 = vmatprep.subr.mxu0 0.0
  %1682 = vmatpush1.msra.mxu0 0.0
  %1683 = vmatprep.subr.mxu0 0.0
  %1684 = vmatpush1.msra.mxu0 0.0
  %1685 = vmatprep.subr.mxu0 0.0
  %1686 = vmatpush1.msra.mxu0 0.0
  %1687 = vmatprep.subr.mxu0 0.0
  %1688 = vmatpush1.msra.mxu0 0.0
  %1689 = vmatprep.subr.mxu0 0.0
  %1690 = vmatpush1.msra.mxu0 %v1024
  %1691 = vmatprep.subr.mxu0 0.0
  %1692 = vmatpush1.msra.mxu0 %v1023
  %1693 = vmatprep.subr.mxu0 0.0
  %1694 = vmatpush1.msra.mxu0 %v1022
  %1695 = vmatprep.subr.mxu0 0.0
  %1696 = vmatpush1.msra.mxu0 %v1021
  %1697 = vmatprep.subr.mxu0 0.0
  %1698 = vmatpush2.msra.mxu0 0.0
  %1699 = vmatprep.subr.mxu0 0.0
  %1700 = vmatpush2.msra.mxu0 0.0
  %1701 = vmatprep.subr.mxu0 0.0
  %1702 = vmatpush2.msra.mxu0 0.0
  %1703 = vmatprep.subr.mxu0 0.0
  %1704 = vmatpush2.msra.mxu0 0.0
  %1705 = vmatprep.subr.mxu0 0.0
  %1706 = vmatpush2.msra.mxu0 0.0
  %1707 = vmatprep.subr.mxu0 0.0
  %1708 = vmatpush2.msra.mxu0 0.0
  %1709 = vmatprep.subr.mxu0 0.0
  %1710 = vmatpush2.msra.mxu0 0.0
  %1711 = vmatprep.subr.mxu0 0.0
  %1712 = vmatpush2.msra.mxu0 0.0
  %1713 = vmatprep.subr.mxu0 0.0
  %1714 = vmatpush2.msra.mxu0 0.0
  %1715 = vmatprep.subr.mxu0 0.0
  %1716 = vmatpush2.msra.mxu0 0.0
  %1717 = vmatprep.subr.mxu0 0.0
  %1718 = vmatpush2.msra.mxu0 0.0
  %1719 = vmatprep.subr.mxu0 0.0
  %1720 = vmatpush2.msra.mxu0 0.0
  %1721 = vmatprep.subr.mxu0 0.0
  %1722 = vmatpush2.msra.mxu0 0.0
  %1723 = vmatprep.subr.mxu0 0.0
  %1724 = vmatpush2.msra.mxu0 0.0
  %1725 = vmatprep.subr.mxu0 0.0
  %1726 = vmatpush2.msra.mxu0 0.0
  %1727 = vmatprep.subr.mxu0 0.0
  %1728 = vmatpush2.msra.mxu0 0.0
  %1729 = vmatprep.mubr.f32.mxu0 0.0
  %1730 = vmatmul.mubr.f32.gmra.mxu0 %v1663
  %v1731 = vpop.f32.mrf.mxu0
  %v1732 = vadd.f32 0.0, %v1731
  %v1733 = vpop.f32.mrf.mxu0
  %1734 = vdwg.mxu0
  %v1735 = vadd.f32 %v1152, %v1732
  %v1736 = vxor.u32 %v1735, 2147483648
  %v1737 = vmul.f32 %v1736, 1.442695
  %v1738 = vpow.pop %v1737
  %v1739 = vadd.f32 %v1738, 1.0
  %v1740 = vrcp.pop %v1739
  %v1741 = vmul.f32 1.0, %v1740
  %v1742 = vtanh.pop %v1735
  %v1743 = vmul.f32 %v1741, %v1653
  %1745 = vrot.lane.b32.xlu0 %v1742, 64
  %v1746 = vpop.permute.xlu0 %1745
  %v1748 = vmul.f32 %v1741, %v1746
  %1750 = vrot.lane.b32.xlu0 %v1748, 32
  %v1751 = vpop.permute.xlu0 %1750
  %v1753 = vadd.f32 %v1743, %v1751
  %v1754 = vtanh.pop %v1753
  %1756 = vrot.lane.b32.xlu0 %v1754, 64
  %v1757 = vpop.permute.xlu0 %1756
  %v1759 = vmul.f32 %v1741, %v1757
  %1761 = vrot.lane.b32.xlu0 %v1759, 32
  %v1762 = vpop.permute.xlu0 %1761
  %v1763 = vsel %vm188, %v1762, 0
  %1765 = vmatprep.subr.mxu0 0.0
  %1766 = vmatpush1.msra.mxu0 0.0
  %1767 = vmatprep.subr.mxu0 0.0
  %1768 = vmatpush1.msra.mxu0 0.0
  %1769 = vmatprep.subr.mxu0 0.0
  %1770 = vmatpush1.msra.mxu0 0.0
  %1771 = vmatprep.subr.mxu0 0.0
  %1772 = vmatpush1.msra.mxu0 0.0
  %1773 = vmatprep.subr.mxu0 0.0
  %1774 = vmatpush1.msra.mxu0 0.0
  %1775 = vmatprep.subr.mxu0 0.0
  %1776 = vmatpush1.msra.mxu0 0.0
  %1777 = vmatprep.subr.mxu0 0.0
  %1778 = vmatpush1.msra.mxu0 0.0
  %1779 = vmatprep.subr.mxu0 0.0
  %1780 = vmatpush1.msra.mxu0 0.0
  %1781 = vmatprep.subr.mxu0 0.0
  %1782 = vmatpush1.msra.mxu0 0.0
  %1783 = vmatprep.subr.mxu0 0.0
  %1784 = vmatpush1.msra.mxu0 0.0
  %1785 = vmatprep.subr.mxu0 0.0
  %1786 = vmatpush1.msra.mxu0 0.0
  %1787 = vmatprep.subr.mxu0 0.0
  %1788 = vmatpush1.msra.mxu0 0.0
  %1789 = vmatprep.subr.mxu0 0.0
  %1790 = vmatpush1.msra.mxu0 %v1024
  %1791 = vmatprep.subr.mxu0 0.0
  %1792 = vmatpush1.msra.mxu0 %v1023
  %1793 = vmatprep.subr.mxu0 0.0
  %1794 = vmatpush1.msra.mxu0 %v1022
  %1795 = vmatprep.subr.mxu0 0.0
  %1796 = vmatpush1.msra.mxu0 %v1021
  %1797 = vmatprep.subr.mxu0 0.0
  %1798 = vmatpush2.msra.mxu0 0.0
  %1799 = vmatprep.subr.mxu0 0.0
  %1800 = vmatpush2.msra.mxu0 0.0
  %1801 = vmatprep.subr.mxu0 0.0
  %1802 = vmatpush2.msra.mxu0 0.0
  %1803 = vmatprep.subr.mxu0 0.0
  %1804 = vmatpush2.msra.mxu0 0.0
  %1805 = vmatprep.subr.mxu0 0.0
  %1806 = vmatpush2.msra.mxu0 0.0
  %1807 = vmatprep.subr.mxu0 0.0
  %1808 = vmatpush2.msra.mxu0 0.0
  %1809 = vmatprep.subr.mxu0 0.0
  %1810 = vmatpush2.msra.mxu0 0.0
  %1811 = vmatprep.subr.mxu0 0.0
  %1812 = vmatpush2.msra.mxu0 0.0
  %1813 = vmatprep.subr.mxu0 0.0
  %1814 = vmatpush2.msra.mxu0 0.0
  %1815 = vmatprep.subr.mxu0 0.0
  %1816 = vmatpush2.msra.mxu0 0.0
  %1817 = vmatprep.subr.mxu0 0.0
  %1818 = vmatpush2.msra.mxu0 0.0
  %1819 = vmatprep.subr.mxu0 0.0
  %1820 = vmatpush2.msra.mxu0 0.0
  %1821 = vmatprep.subr.mxu0 0.0
  %1822 = vmatpush2.msra.mxu0 0.0
  %1823 = vmatprep.subr.mxu0 0.0
  %1824 = vmatpush2.msra.mxu0 0.0
  %1825 = vmatprep.subr.mxu0 0.0
  %1826 = vmatpush2.msra.mxu0 0.0
  %1827 = vmatprep.subr.mxu0 0.0
  %1828 = vmatpush2.msra.mxu0 0.0
  %1829 = vmatprep.mubr.f32.mxu0 0.0
  %1830 = vmatmul.mubr.f32.gmra.mxu0 %v1763
  %v1831 = vpop.f32.mrf.mxu0
  %v1832 = vadd.f32 0.0, %v1831
  %v1833 = vpop.f32.mrf.mxu0
  %1834 = vdwg.mxu0
  %v1835 = vadd.f32 %v1157, %v1832
  %v1836 = vxor.u32 %v1835, 2147483648
  %v1837 = vmul.f32 %v1836, 1.442695
  %v1838 = vpow.pop %v1837
  %v1839 = vadd.f32 %v1838, 1.0
  %v1840 = vrcp.pop %v1839
  %v1841 = vmul.f32 1.0, %v1840
  %v1842 = vtanh.pop %v1835
  %v1843 = vmul.f32 %v1841, %v1753
  %1845 = vrot.lane.b32.xlu0 %v1842, 64
  %v1846 = vpop.permute.xlu0 %1845
  %v1848 = vmul.f32 %v1841, %v1846
  %1850 = vrot.lane.b32.xlu0 %v1848, 32
  %v1851 = vpop.permute.xlu0 %1850
  %v1853 = vadd.f32 %v1843, %v1851
  %v1854 = vtanh.pop %v1853
  %1856 = vrot.lane.b32.xlu0 %v1854, 64
  %v1857 = vpop.permute.xlu0 %1856
  %v1859 = vmul.f32 %v1841, %v1857
  %1861 = vrot.lane.b32.xlu0 %v1859, 32
  %v1862 = vpop.permute.xlu0 %1861
  %v1863 = vsel %vm188, %v1862, 0
  %1865 = vmatprep.subr.mxu0 0.0
  %1866 = vmatpush1.msra.mxu0 0.0
  %1867 = vmatprep.subr.mxu0 0.0
  %1868 = vmatpush1.msra.mxu0 0.0
  %1869 = vmatprep.subr.mxu0 0.0
  %1870 = vmatpush1.msra.mxu0 0.0
  %1871 = vmatprep.subr.mxu0 0.0
  %1872 = vmatpush1.msra.mxu0 0.0
  %1873 = vmatprep.subr.mxu0 0.0
  %1874 = vmatpush1.msra.mxu0 0.0
  %1875 = vmatprep.subr.mxu0 0.0
  %1876 = vmatpush1.msra.mxu0 0.0
  %1877 = vmatprep.subr.mxu0 0.0
  %1878 = vmatpush1.msra.mxu0 0.0
  %1879 = vmatprep.subr.mxu0 0.0
  %1880 = vmatpush1.msra.mxu0 0.0
  %1881 = vmatprep.subr.mxu0 0.0
  %1882 = vmatpush1.msra.mxu0 0.0
  %1883 = vmatprep.subr.mxu0 0.0
  %1884 = vmatpush1.msra.mxu0 0.0
  %1885 = vmatprep.subr.mxu0 0.0
  %1886 = vmatpush1.msra.mxu0 0.0
  %1887 = vmatprep.subr.mxu0 0.0
  %1888 = vmatpush1.msra.mxu0 0.0
  %1889 = vmatprep.subr.mxu0 0.0
  %1890 = vmatpush1.msra.mxu0 %v1024
  %1891 = vmatprep.subr.mxu0 0.0
  %1892 = vmatpush1.msra.mxu0 %v1023
  %1893 = vmatprep.subr.mxu0 0.0
  %1894 = vmatpush1.msra.mxu0 %v1022
  %1895 = vmatprep.subr.mxu0 0.0
  %1896 = vmatpush1.msra.mxu0 %v1021
  %1897 = vmatprep.subr.mxu0 0.0
  %1898 = vmatpush2.msra.mxu0 0.0
  %1899 = vmatprep.subr.mxu0 0.0
  %1900 = vmatpush2.msra.mxu0 0.0
  %1901 = vmatprep.subr.mxu0 0.0
  %1902 = vmatpush2.msra.mxu0 0.0
  %1903 = vmatprep.subr.mxu0 0.0
  %1904 = vmatpush2.msra.mxu0 0.0
  %1905 = vmatprep.subr.mxu0 0.0
  %1906 = vmatpush2.msra.mxu0 0.0
  %1907 = vmatprep.subr.mxu0 0.0
  %1908 = vmatpush2.msra.mxu0 0.0
  %1909 = vmatprep.subr.mxu0 0.0
  %1910 = vmatpush2.msra.mxu0 0.0
  %1911 = vmatprep.subr.mxu0 0.0
  %1912 = vmatpush2.msra.mxu0 0.0
  %1913 = vmatprep.subr.mxu0 0.0
  %1914 = vmatpush2.msra.mxu0 0.0
  %1915 = vmatprep.subr.mxu0 0.0
  %1916 = vmatpush2.msra.mxu0 0.0
  %1917 = vmatprep.subr.mxu0 0.0
  %1918 = vmatpush2.msra.mxu0 0.0
  %1919 = vmatprep.subr.mxu0 0.0
  %1920 = vmatpush2.msra.mxu0 0.0
  %1921 = vmatprep.subr.mxu0 0.0
  %1922 = vmatpush2.msra.mxu0 0.0
  %1923 = vmatprep.subr.mxu0 0.0
  %1924 = vmatpush2.msra.mxu0 0.0
  %1925 = vmatprep.subr.mxu0 0.0
  %1926 = vmatpush2.msra.mxu0 0.0
  %1927 = vmatprep.subr.mxu0 0.0
  %1928 = vmatpush2.msra.mxu0 0.0
  %1929 = vmatprep.mubr.f32.mxu0 0.0
  %1930 = vmatmul.mubr.f32.gmra.mxu0 %v1863
  %v1931 = vpop.f32.mrf.mxu0
  %v1932 = vadd.f32 0.0, %v1931
  %v1933 = vpop.f32.mrf.mxu0
  %1934 = vdwg.mxu0
  %v1935 = vadd.f32 %v1162, %v1932
  %v1936 = vxor.u32 %v1935, 2147483648
  %v1937 = vmul.f32 %v1936, 1.442695
  %v1938 = vpow.pop %v1937
  %v1939 = vadd.f32 %v1938, 1.0
  %v1940 = vrcp.pop %v1939
  %v1941 = vmul.f32 1.0, %v1940
  %v1942 = vtanh.pop %v1935
  %v1943 = vmul.f32 %v1941, %v1853
  %1945 = vrot.lane.b32.xlu0 %v1942, 64
  %v1946 = vpop.permute.xlu0 %1945
  %v1948 = vmul.f32 %v1941, %v1946
  %1950 = vrot.lane.b32.xlu0 %v1948, 32
  %v1951 = vpop.permute.xlu0 %1950
  %v1953 = vadd.f32 %v1943, %v1951
  %v1954 = vtanh.pop %v1953
  %1956 = vrot.lane.b32.xlu0 %v1954, 64
  %v1957 = vpop.permute.xlu0 %1956
  %v1959 = vmul.f32 %v1941, %v1957
  %v1960 = vld [vmem:[%s7] sm:$0xff]
  %v1961 = vld [vmem:[%s7 + $0x8] sm:$0xff]
  %v1962 = vld [vmem:[%s7 + $0x10] sm:$0xff]
  %v1963 = vld [vmem:[%s7 + $0x18] sm:$0xff]
  %v1964 = vld [vmem:[%s8] sm:$0x1]
  %v1966 = vlaneseq
  %v1967 = vshrl.u32 %v1966, 7
  %v1968 = vsub.s32 0, %v1967
  %v1969 = vrot.slane %v1964, %v1968
  %1972 = vrot.lane.b32.xlu0 %v1959, 32
  %v1973 = vpop.permute.xlu0 %1972
  %v1974 = vsel %vm188, %v1973, 0
  %1976 = vmatprep.subr.mxu0 0.0
  %1977 = vmatpush1.msra.mxu0 0.0
  %1978 = vmatprep.subr.mxu0 0.0
  %1979 = vmatpush1.msra.mxu0 0.0
  %1980 = vmatprep.subr.mxu0 0.0
  %1981 = vmatpush1.msra.mxu0 0.0
  %1982 = vmatprep.subr.mxu0 0.0
  %1983 = vmatpush1.msra.mxu0 0.0
  %1984 = vmatprep.subr.mxu0 0.0
  %1985 = vmatpush1.msra.mxu0 0.0
  %1986 = vmatprep.subr.mxu0 0.0
  %1987 = vmatpush1.msra.mxu0 0.0
  %1988 = vmatprep.subr.mxu0 0.0
  %1989 = vmatpush1.msra.mxu0 0.0
  %1990 = vmatprep.subr.mxu0 0.0
  %1991 = vmatpush1.msra.mxu0 0.0
  %1992 = vmatprep.subr.mxu0 0.0
  %1993 = vmatpush1.msra.mxu0 0.0
  %1994 = vmatprep.subr.mxu0 0.0
  %1995 = vmatpush1.msra.mxu0 0.0
  %1996 = vmatprep.subr.mxu0 0.0
  %1997 = vmatpush1.msra.mxu0 0.0
  %1998 = vmatprep.subr.mxu0 0.0
  %1999 = vmatpush1.msra.mxu0 0.0
  %2000 = vmatprep.subr.mxu0 0.0
  %2001 = vmatpush1.msra.mxu0 %v1963
  %2002 = vmatprep.subr.mxu0 0.0
  %2003 = vmatpush1.msra.mxu0 %v1962
  %2004 = vmatprep.subr.mxu0 0.0
  %2005 = vmatpush1.msra.mxu0 %v1961
  %2006 = vmatprep.subr.mxu0 0.0
  %2007 = vmatpush1.msra.mxu0 %v1960
  %2008 = vmatprep.subr.mxu0 0.0
  %2009 = vmatpush2.msra.mxu0 0.0
  %2010 = vmatprep.subr.mxu0 0.0
  %2011 = vmatpush2.msra.mxu0 0.0
  %2012 = vmatprep.subr.mxu0 0.0
  %2013 = vmatpush2.msra.mxu0 0.0
  %2014 = vmatprep.subr.mxu0 0.0
  %2015 = vmatpush2.msra.mxu0 0.0
  %2016 = vmatprep.subr.mxu0 0.0
  %2017 = vmatpush2.msra.mxu0 0.0
  %2018 = vmatprep.subr.mxu0 0.0
  %2019 = vmatpush2.msra.mxu0 0.0
  %2020 = vmatprep.subr.mxu0 0.0
  %2021 = vmatpush2.msra.mxu0 0.0
  %2022 = vmatprep.subr.mxu0 0.0
  %2023 = vmatpush2.msra.mxu0 0.0
  %2024 = vmatprep.subr.mxu0 0.0
  %2025 = vmatpush2.msra.mxu0 0.0
  %2026 = vmatprep.subr.mxu0 0.0
  %2027 = vmatpush2.msra.mxu0 0.0
  %2028 = vmatprep.subr.mxu0 0.0
  %2029 = vmatpush2.msra.mxu0 0.0
  %2030 = vmatprep.subr.mxu0 0.0
  %2031 = vmatpush2.msra.mxu0 0.0
  %2032 = vmatprep.subr.mxu0 0.0
  %2033 = vmatpush2.msra.mxu0 0.0
  %2034 = vmatprep.subr.mxu0 0.0
  %2035 = vmatpush2.msra.mxu0 0.0
  %2036 = vmatprep.subr.mxu0 0.0
  %2037 = vmatpush2.msra.mxu0 0.0
  %2038 = vmatprep.subr.mxu0 0.0
  %2039 = vmatpush2.msra.mxu0 0.0
  %2040 = vmatprep.mubr.f32.mxu0 0.0
  %2041 = vmatmul.mubr.f32.gmra.mxu0 %v1974
  %v2042 = vpop.f32.mrf.mxu0
  %v2043 = vadd.f32 %v1969, %v2042
  %v2044 = vpop.f32.mrf.mxu0
  %2045 = vdwg.mxu0
  %v2046 = vmax.f32 %v2043, 0.0
  %v2047 = vld [vmem:[%s9] sm:$0xff]
  %v2048 = vld [vmem:[%s9 + $0x8] sm:$0xff]
  %v2049 = vld [vmem:[%s10] sm:$0x1]
  %v2051 = vlaneseq
  %v2052 = vshrl.u32 %v2051, 7
  %v2053 = vsub.s32 0, %v2052
  %v2054 = vrot.slane %v2049, %v2053
  %vm2056 = vcmask 130048
  %v2058 = vsel %vm2056, %v2046, 0
  %2060 = vmatprep.subr.mxu0 0.0
  %2061 = vmatpush1.msra.mxu0 0.0
  %2062 = vmatprep.subr.mxu0 0.0
  %2063 = vmatpush1.msra.mxu0 0.0
  %2064 = vmatprep.subr.mxu0 0.0
  %2065 = vmatpush1.msra.mxu0 0.0
  %2066 = vmatprep.subr.mxu0 0.0
  %2067 = vmatpush1.msra.mxu0 0.0
  %2068 = vmatprep.subr.mxu0 0.0
  %2069 = vmatpush1.msra.mxu0 0.0
  %2070 = vmatprep.subr.mxu0 0.0
  %2071 = vmatpush1.msra.mxu0 0.0
  %2072 = vmatprep.subr.mxu0 0.0
  %2073 = vmatpush1.msra.mxu0 0.0
  %2074 = vmatprep.subr.mxu0 0.0
  %2075 = vmatpush1.msra.mxu0 0.0
  %2076 = vmatprep.subr.mxu0 0.0
  %2077 = vmatpush1.msra.mxu0 0.0
  %2078 = vmatprep.subr.mxu0 0.0
  %2079 = vmatpush1.msra.mxu0 0.0
  %2080 = vmatprep.subr.mxu0 0.0
  %2081 = vmatpush1.msra.mxu0 0.0
  %2082 = vmatprep.subr.mxu0 0.0
  %2083 = vmatpush1.msra.mxu0 0.0
  %2084 = vmatprep.subr.mxu0 0.0
  %2085 = vmatpush1.msra.mxu0 0.0
  %2086 = vmatprep.subr.mxu0 0.0
  %2087 = vmatpush1.msra.mxu0 0.0
  %2088 = vmatprep.subr.mxu0 0.0
  %2089 = vmatpush1.msra.mxu0 %v2048
  %2090 = vmatprep.subr.mxu0 0.0
  %2091 = vmatpush1.msra.mxu0 %v2047
  %2092 = vmatprep.subr.mxu0 0.0
  %2093 = vmatpush2.msra.mxu0 0.0
  %2094 = vmatprep.subr.mxu0 0.0
  %2095 = vmatpush2.msra.mxu0 0.0
  %2096 = vmatprep.subr.mxu0 0.0
  %2097 = vmatpush2.msra.mxu0 0.0
  %2098 = vmatprep.subr.mxu0 0.0
  %2099 = vmatpush2.msra.mxu0 0.0
  %2100 = vmatprep.subr.mxu0 0.0
  %2101 = vmatpush2.msra.mxu0 0.0
  %2102 = vmatprep.subr.mxu0 0.0
  %2103 = vmatpush2.msra.mxu0 0.0
  %2104 = vmatprep.subr.mxu0 0.0
  %2105 = vmatpush2.msra.mxu0 0.0
  %2106 = vmatprep.subr.mxu0 0.0
  %2107 = vmatpush2.msra.mxu0 0.0
  %2108 = vmatprep.subr.mxu0 0.0
  %2109 = vmatpush2.msra.mxu0 0.0
  %2110 = vmatprep.subr.mxu0 0.0
  %2111 = vmatpush2.msra.mxu0 0.0
  %2112 = vmatprep.subr.mxu0 0.0
  %2113 = vmatpush2.msra.mxu0 0.0
  %2114 = vmatprep.subr.mxu0 0.0
  %2115 = vmatpush2.msra.mxu0 0.0
  %2116 = vmatprep.subr.mxu0 0.0
  %2117 = vmatpush2.msra.mxu0 0.0
  %2118 = vmatprep.subr.mxu0 0.0
  %2119 = vmatpush2.msra.mxu0 0.0
  %2120 = vmatprep.subr.mxu0 0.0
  %2121 = vmatpush2.msra.mxu0 0.0
  %2122 = vmatprep.subr.mxu0 0.0
  %2123 = vmatpush2.msra.mxu0 0.0
  %2124 = vmatprep.mubr.f32.mxu0 0.0
  %2125 = vmatmul.mubr.f32.gmra.mxu0 %v2058
  %v2126 = vpop.f32.mrf.mxu0
  %v2127 = vadd.f32 %v2054, %v2126
  %v2128 = vpop.f32.mrf.mxu0
  %2129 = vdwg.mxu0
  %vm2130 = vcmask 31744
  %2131 = vst.msk [vmem:[%s11] sm:$0xff] %vm2130, %v2127
  // Predicated region
  $region46: #{lstm_forecaster_forward.1} parent=0 // pred_check
    _
  $region47: #{lstm_forecaster_forward.1} parent=0 // pred_check_branch
    %2133 = sbr.rel (0) target = $region49
  $region48: #{lstm_forecaster_forward.1} parent=0 // pred_region
    _
  $region49: #{lstm_forecaster_forward.1} parent=0 // pred_fallthru
    _
  // Predicated region
  $region50: #{lstm_forecaster_forward.1} parent=0 // pred_check
    _
  $region51: #{lstm_forecaster_forward.1} parent=0 // pred_check_branch
    %2135 = sbr.rel (0) target = $region53
  $region52: #{lstm_forecaster_forward.1} parent=0 // pred_region
    _
  $region53: #{lstm_forecaster_forward.1} parent=0 // pred_fallthru
    _

</llo_original>
